<compile_context>
chip_gen: v7x
topology: tpu7x:2x2x1
jax: 0.10.0
libtpu: 0.0.40
codegen_flags: <defaults>
</compile_context>

<pallas_src>
import jax
import jax.numpy as jnp
from jax.experimental import pallas as pl
from jax.experimental.pallas import tpu as pltpu

EPS = 1e-5
F_PAD = 256      # common padded feature width (max layer width)
N_LAYERS = 8

# (in_features, out_features) for the 8 linear layers, in forward order.
LAYER_DIMS = [
    (15, 64),    # fc_e1
    (64, 128),   # fc_e2
    (128, 256),  # fc_e3
    (256, 128),  # fc_e4
    (128, 64),   # fc_e5
    (64, 128),   # fc1_2
    (128, 64),   # fc2_2
    (64, 1),     # fc3_2  (no BN / no ReLU)
]


def _edecoder_kernel(x_ref, w_ref, gamma_ref, beta_ref, o_ref):
    n = x_ref.shape[0]
    inv_n = jnp.float32(1.0 / n)

    h = x_ref[...]  # [N, 256] f32, zero-padded beyond the 15 real features

    # 7 x (Linear -> BatchNorm1d(train) -> ReLU), all in the 256-lane space.
    for li in range(7):
        y = jnp.dot(h, w_ref[li], preferred_element_type=jnp.float32)
        # Single-pass batch stats (both cross-sublane reductions issue together).
        s1 = jnp.sum(y, axis=0, keepdims=True)          # [1, 256]
        s2 = jnp.sum(y * y, axis=0, keepdims=True)      # [1, 256]
        mean = s1 * inv_n
        var = jnp.maximum(s2 * inv_n - mean * mean, 0.0)  # biased variance
        inv = jax.lax.rsqrt(var + EPS)
        # Fold normalize + affine into one multiply-add.
        scale = gamma_ref[li:li + 1, :] * inv            # [1, 256]
        shift = beta_ref[li:li + 1, :] - mean * scale    # [1, 256]
        h = jnp.maximum(y * scale + shift, 0.0)          # ReLU

    # fc3_2 (64 -> 1): VPU multiply + lane (XLU) reduction; avoids an MXU
    # push/drain that would produce a single useful output column.
    w8 = w_ref[7, 0:1, :]        # [1, 256] transposed weight row, zero-padded
    b8 = beta_ref[7:8, 0:1]      # [1, 1]   final-layer bias (stashed here)
    o_ref[...] = (jnp.sum(h * w8, axis=-1, keepdims=True) + b8).astype(o_ref.dtype)


def init_params(key):
    """Deterministic parameter init, same shapes/semantics as the PyTorch module."""
    params = []
    for li, (fin, fout) in enumerate(LAYER_DIMS):
        kw, kb = jax.random.split(jax.random.fold_in(key, li))
        bound = 1.0 / jnp.sqrt(jnp.float32(fin))
        w = jax.random.uniform(kw, (fin, fout), jnp.float32, -bound, bound)
        b = jax.random.uniform(kb, (1, fout), jnp.float32, -bound, bound)
        params.append(w)
        params.append(b)
        if li < 7:  # BatchNorm affine params (default init: gamma=1, beta=0)
            params.append(jnp.ones((1, fout), jnp.float32))
            params.append(jnp.zeros((1, fout), jnp.float32))
    return params


def pack_params(params):
    """Pack the 31 PyTorch-style param arrays into 3 VMEM-friendly slabs (one-time)."""
    w_slab = jnp.zeros((N_LAYERS, F_PAD, F_PAD), jnp.float32)
    gamma_slab = jnp.zeros((8, F_PAD), jnp.float32)
    beta_slab = jnp.zeros((8, F_PAD), jnp.float32)
    idx = 0
    for li, (fin, fout) in enumerate(LAYER_DIMS):
        w, b = params[idx], params[idx + 1]
        idx += 2
        if li < 7:
            g, be = params[idx], params[idx + 1]
            idx += 2
            # NOTE: the Linear bias is dropped here — it precedes training-mode
            # BatchNorm, so the batch-mean subtraction cancels it exactly.
            w_slab = w_slab.at[li, :fin, :fout].set(w)
            gamma_slab = gamma_slab.at[li, :fout].set(g[0])
            beta_slab = beta_slab.at[li, :fout].set(be[0])
        else:
            # fc3_2: store its (64,1) weight transposed into row 0 of slab layer 7
            # so the kernel can do a lane-wise multiply + reduction; stash its
            # scalar bias in the otherwise-unused beta row 7.
            w_slab = w_slab.at[li, 0, :fin].set(w[:, 0])
            beta_slab = beta_slab.at[7, 0].set(b[0, 0])
    return w_slab, gamma_slab, beta_slab


def edecoder_forward(x, packed):
    w_slab, gamma_slab, beta_slab = packed
    n = x.shape[0]
    assert n > 1, "training-mode BatchNorm1d requires batch size > 1"
    # Pad the 15 input features to the common 256-lane width (cheap, outside kernel).
    x_pad = jnp.zeros((n, F_PAD), jnp.float32).at[:, : x.shape[1]].set(
        x.astype(jnp.float32)
    )
    # No grid: everything (~2.3 MB) fits in VMEM as single full-array blocks,
    # so the whole MLP runs in one kernel invocation with 4 input DMAs.
    out = pl.pallas_call(
        _edecoder_kernel,
        out_shape=jax.ShapeDtypeStruct((n, 1), jnp.float32),
        in_specs=[pl.BlockSpec(memory_space=pltpu.MemorySpace.VMEM)] * 4,
        out_specs=pl.BlockSpec(memory_space=pltpu.MemorySpace.VMEM),
    )(x_pad, w_slab, gamma_slab, beta_slab)
    return (out,)


def reference_forward(x, params):
    """Plain-JAX reference with full PyTorch semantics (incl. Linear biases)."""
    h = x.astype(jnp.float32)
    idx = 0
    for li in range(8):
        w, b = params[idx], params[idx + 1]
        h = jnp.dot(h, w) + b
        idx += 2
        if li < 7:
            g, be = params[idx], params[idx + 1]
            idx += 2
            mean = jnp.mean(h, axis=0, keepdims=True)
            var = jnp.mean((h - mean) ** 2, axis=0, keepdims=True)
            h = (h - mean) / jnp.sqrt(var + EPS)
            h = h * g + be
            h = jnp.maximum(h, 0.0)
    return (h,)


if __name__ == "__main__":
    key = jax.random.PRNGKey(0)
    kx, kp = jax.random.split(key)

    N = 16  # batch size (BatchNorm training mode needs N > 1)
    x = jax.random.normal(kx, (N, 15), jnp.float32)
    params = init_params(kp)
    packed = pack_params(params)

    (out,) = edecoder_forward(x, packed)
    out = jax.block_until_ready(out)

    (ref,) = reference_forward(x, params)
    assert out.shape == (N, 1), out.shape
    max_err = float(jnp.max(jnp.abs(out - ref)))
    assert max_err < 1e-3, max_err
    print("KERNEL_OK")
</pallas_src>

<mosaic_0001>
module attributes {stable_mosaic.version = 11 : i64} {
  func.func @_edecoder_kernel(%arg0: memref<16x256xf32, #tpu.memory_space<vmem>>, %arg1: memref<8x256x256xf32, #tpu.memory_space<vmem>>, %arg2: memref<8x256xf32, #tpu.memory_space<vmem>>, %arg3: memref<8x256xf32, #tpu.memory_space<vmem>>, %arg4: memref<16x1xf32, #tpu.memory_space<vmem>>) attributes {dimension_semantics = [], scalar_prefetch = 0 : i64, scratch_operands = 0 : i64, tpu.core_type = #tpu.core_type<tc>} {
    %c0 = arith.constant 0 : index
    %c0_0 = arith.constant 0 : index
    %0 = vector.load %arg0[%c0, %c0_0] : memref<16x256xf32, #tpu.memory_space<vmem>>, vector<16x256xf32>
    %c0_1 = arith.constant 0 : index
    %c0_2 = arith.constant 0 : index
    %c0_3 = arith.constant 0 : index
    %1 = vector.load %arg1[%c0_1, %c0_2, %c0_3] : memref<8x256x256xf32, #tpu.memory_space<vmem>>, vector<1x256x256xf32>
    %2 = vector.shape_cast %1 : vector<1x256x256xf32> to vector<256x256xf32>
    %cst = arith.constant dense<0.000000e+00> : vector<16x256xf32>
    %3 = tpu.matmul %0, %2, %cst {dimension_numbers = #tpu.dot_dimension_numbers<[1], [0], [0], [1], [0, 0, 1, 1], [], []>} : vector<16x256xf32>, vector<256x256xf32>, vector<16x256xf32> -> vector<16x256xf32>
    %cst_4 = arith.constant dense<0.000000e+00> : vector<256xf32>
    %4 = vector.multi_reduction <add>, %3, %cst_4 [0] : vector<16x256xf32> to vector<256xf32>
    %5 = vector.shape_cast %4 : vector<256xf32> to vector<1x256xf32>
    %6 = arith.mulf %3, %3 : vector<16x256xf32>
    %cst_5 = arith.constant dense<0.000000e+00> : vector<256xf32>
    %7 = vector.multi_reduction <add>, %6, %cst_5 [0] : vector<16x256xf32> to vector<256xf32>
    %8 = vector.shape_cast %7 : vector<256xf32> to vector<1x256xf32>
    %cst_6 = arith.constant 6.250000e-02 : f32
    %9 = vector.broadcast %cst_6 : f32 to vector<1x256xf32>
    %10 = arith.mulf %5, %9 : vector<1x256xf32>
    %cst_7 = arith.constant 6.250000e-02 : f32
    %11 = vector.broadcast %cst_7 : f32 to vector<1x256xf32>
    %12 = arith.mulf %8, %11 : vector<1x256xf32>
    %13 = arith.mulf %10, %10 : vector<1x256xf32>
    %14 = arith.subf %12, %13 : vector<1x256xf32>
    %cst_8 = arith.constant 0.000000e+00 : f32
    %15 = vector.broadcast %cst_8 : f32 to vector<1x256xf32>
    %16 = arith.maximumf %14, %15 : vector<1x256xf32>
    %cst_9 = arith.constant 9.99999974E-6 : f32
    %17 = vector.broadcast %cst_9 : f32 to vector<1x256xf32>
    %18 = arith.addf %16, %17 : vector<1x256xf32>
    %19 = math.rsqrt %18 : vector<1x256xf32>
    %c0_10 = arith.constant 0 : index
    %c0_11 = arith.constant 0 : index
    %20 = vector.load %arg2[%c0_10, %c0_11] : memref<8x256xf32, #tpu.memory_space<vmem>>, vector<1x256xf32>
    %21 = arith.mulf %20, %19 : vector<1x256xf32>
    %c0_12 = arith.constant 0 : index
    %c0_13 = arith.constant 0 : index
    %22 = vector.load %arg3[%c0_12, %c0_13] : memref<8x256xf32, #tpu.memory_space<vmem>>, vector<1x256xf32>
    %23 = arith.mulf %10, %21 : vector<1x256xf32>
    %24 = arith.subf %22, %23 : vector<1x256xf32>
    %25 = vector.broadcast %21 : vector<1x256xf32> to vector<16x256xf32>
    %26 = arith.mulf %3, %25 : vector<16x256xf32>
    %27 = vector.broadcast %24 : vector<1x256xf32> to vector<16x256xf32>
    %28 = arith.addf %26, %27 : vector<16x256xf32>
    %cst_14 = arith.constant 0.000000e+00 : f32
    %29 = vector.broadcast %cst_14 : f32 to vector<16x256xf32>
    %30 = arith.maximumf %28, %29 : vector<16x256xf32>
    %c1 = arith.constant 1 : index
    %c0_15 = arith.constant 0 : index
    %c0_16 = arith.constant 0 : index
    %31 = vector.load %arg1[%c1, %c0_15, %c0_16] : memref<8x256x256xf32, #tpu.memory_space<vmem>>, vector<1x256x256xf32>
    %32 = vector.shape_cast %31 : vector<1x256x256xf32> to vector<256x256xf32>
    %cst_17 = arith.constant dense<0.000000e+00> : vector<16x256xf32>
    %33 = tpu.matmul %30, %32, %cst_17 {dimension_numbers = #tpu.dot_dimension_numbers<[1], [0], [0], [1], [0, 0, 1, 1], [], []>} : vector<16x256xf32>, vector<256x256xf32>, vector<16x256xf32> -> vector<16x256xf32>
    %cst_18 = arith.constant dense<0.000000e+00> : vector<256xf32>
    %34 = vector.multi_reduction <add>, %33, %cst_18 [0] : vector<16x256xf32> to vector<256xf32>
    %35 = vector.shape_cast %34 : vector<256xf32> to vector<1x256xf32>
    %36 = arith.mulf %33, %33 : vector<16x256xf32>
    %cst_19 = arith.constant dense<0.000000e+00> : vector<256xf32>
    %37 = vector.multi_reduction <add>, %36, %cst_19 [0] : vector<16x256xf32> to vector<256xf32>
    %38 = vector.shape_cast %37 : vector<256xf32> to vector<1x256xf32>
    %cst_20 = arith.constant 6.250000e-02 : f32
    %39 = vector.broadcast %cst_20 : f32 to vector<1x256xf32>
    %40 = arith.mulf %35, %39 : vector<1x256xf32>
    %cst_21 = arith.constant 6.250000e-02 : f32
    %41 = vector.broadcast %cst_21 : f32 to vector<1x256xf32>
    %42 = arith.mulf %38, %41 : vector<1x256xf32>
    %43 = arith.mulf %40, %40 : vector<1x256xf32>
    %44 = arith.subf %42, %43 : vector<1x256xf32>
    %cst_22 = arith.constant 0.000000e+00 : f32
    %45 = vector.broadcast %cst_22 : f32 to vector<1x256xf32>
    %46 = arith.maximumf %44, %45 : vector<1x256xf32>
    %cst_23 = arith.constant 9.99999974E-6 : f32
    %47 = vector.broadcast %cst_23 : f32 to vector<1x256xf32>
    %48 = arith.addf %46, %47 : vector<1x256xf32>
    %49 = math.rsqrt %48 : vector<1x256xf32>
    %c1_24 = arith.constant 1 : index
    %c0_25 = arith.constant 0 : index
    %50 = vector.load %arg2[%c1_24, %c0_25] : memref<8x256xf32, #tpu.memory_space<vmem>>, vector<1x256xf32>
    %51 = arith.mulf %50, %49 : vector<1x256xf32>
    %c1_26 = arith.constant 1 : index
    %c0_27 = arith.constant 0 : index
    %52 = vector.load %arg3[%c1_26, %c0_27] : memref<8x256xf32, #tpu.memory_space<vmem>>, vector<1x256xf32>
    %53 = arith.mulf %40, %51 : vector<1x256xf32>
    %54 = arith.subf %52, %53 : vector<1x256xf32>
    %55 = vector.broadcast %51 : vector<1x256xf32> to vector<16x256xf32>
    %56 = arith.mulf %33, %55 : vector<16x256xf32>
    %57 = vector.broadcast %54 : vector<1x256xf32> to vector<16x256xf32>
    %58 = arith.addf %56, %57 : vector<16x256xf32>
    %cst_28 = arith.constant 0.000000e+00 : f32
    %59 = vector.broadcast %cst_28 : f32 to vector<16x256xf32>
    %60 = arith.maximumf %58, %59 : vector<16x256xf32>
    %c2 = arith.constant 2 : index
    %c0_29 = arith.constant 0 : index
    %c0_30 = arith.constant 0 : index
    %61 = vector.load %arg1[%c2, %c0_29, %c0_30] : memref<8x256x256xf32, #tpu.memory_space<vmem>>, vector<1x256x256xf32>
    %62 = vector.shape_cast %61 : vector<1x256x256xf32> to vector<256x256xf32>
    %cst_31 = arith.constant dense<0.000000e+00> : vector<16x256xf32>
    %63 = tpu.matmul %60, %62, %cst_31 {dimension_numbers = #tpu.dot_dimension_numbers<[1], [0], [0], [1], [0, 0, 1, 1], [], []>} : vector<16x256xf32>, vector<256x256xf32>, vector<16x256xf32> -> vector<16x256xf32>
    %cst_32 = arith.constant dense<0.000000e+00> : vector<256xf32>
    %64 = vector.multi_reduction <add>, %63, %cst_32 [0] : vector<16x256xf32> to vector<256xf32>
    %65 = vector.shape_cast %64 : vector<256xf32> to vector<1x256xf32>
    %66 = arith.mulf %63, %63 : vector<16x256xf32>
    %cst_33 = arith.constant dense<0.000000e+00> : vector<256xf32>
    %67 = vector.multi_reduction <add>, %66, %cst_33 [0] : vector<16x256xf32> to vector<256xf32>
    %68 = vector.shape_cast %67 : vector<256xf32> to vector<1x256xf32>
    %cst_34 = arith.constant 6.250000e-02 : f32
    %69 = vector.broadcast %cst_34 : f32 to vector<1x256xf32>
    %70 = arith.mulf %65, %69 : vector<1x256xf32>
    %cst_35 = arith.constant 6.250000e-02 : f32
    %71 = vector.broadcast %cst_35 : f32 to vector<1x256xf32>
    %72 = arith.mulf %68, %71 : vector<1x256xf32>
    %73 = arith.mulf %70, %70 : vector<1x256xf32>
    %74 = arith.subf %72, %73 : vector<1x256xf32>
    %cst_36 = arith.constant 0.000000e+00 : f32
    %75 = vector.broadcast %cst_36 : f32 to vector<1x256xf32>
    %76 = arith.maximumf %74, %75 : vector<1x256xf32>
    %cst_37 = arith.constant 9.99999974E-6 : f32
    %77 = vector.broadcast %cst_37 : f32 to vector<1x256xf32>
    %78 = arith.addf %76, %77 : vector<1x256xf32>
    %79 = math.rsqrt %78 : vector<1x256xf32>
    %c2_38 = arith.constant 2 : index
    %c0_39 = arith.constant 0 : index
    %80 = vector.load %arg2[%c2_38, %c0_39] : memref<8x256xf32, #tpu.memory_space<vmem>>, vector<1x256xf32>
    %81 = arith.mulf %80, %79 : vector<1x256xf32>
    %c2_40 = arith.constant 2 : index
    %c0_41 = arith.constant 0 : index
    %82 = vector.load %arg3[%c2_40, %c0_41] : memref<8x256xf32, #tpu.memory_space<vmem>>, vector<1x256xf32>
    %83 = arith.mulf %70, %81 : vector<1x256xf32>
    %84 = arith.subf %82, %83 : vector<1x256xf32>
    %85 = vector.broadcast %81 : vector<1x256xf32> to vector<16x256xf32>
    %86 = arith.mulf %63, %85 : vector<16x256xf32>
    %87 = vector.broadcast %84 : vector<1x256xf32> to vector<16x256xf32>
    %88 = arith.addf %86, %87 : vector<16x256xf32>
    %cst_42 = arith.constant 0.000000e+00 : f32
    %89 = vector.broadcast %cst_42 : f32 to vector<16x256xf32>
    %90 = arith.maximumf %88, %89 : vector<16x256xf32>
    %c3 = arith.constant 3 : index
    %c0_43 = arith.constant 0 : index
    %c0_44 = arith.constant 0 : index
    %91 = vector.load %arg1[%c3, %c0_43, %c0_44] : memref<8x256x256xf32, #tpu.memory_space<vmem>>, vector<1x256x256xf32>
    %92 = vector.shape_cast %91 : vector<1x256x256xf32> to vector<256x256xf32>
    %cst_45 = arith.constant dense<0.000000e+00> : vector<16x256xf32>
    %93 = tpu.matmul %90, %92, %cst_45 {dimension_numbers = #tpu.dot_dimension_numbers<[1], [0], [0], [1], [0, 0, 1, 1], [], []>} : vector<16x256xf32>, vector<256x256xf32>, vector<16x256xf32> -> vector<16x256xf32>
    %cst_46 = arith.constant dense<0.000000e+00> : vector<256xf32>
    %94 = vector.multi_reduction <add>, %93, %cst_46 [0] : vector<16x256xf32> to vector<256xf32>
    %95 = vector.shape_cast %94 : vector<256xf32> to vector<1x256xf32>
    %96 = arith.mulf %93, %93 : vector<16x256xf32>
    %cst_47 = arith.constant dense<0.000000e+00> : vector<256xf32>
    %97 = vector.multi_reduction <add>, %96, %cst_47 [0] : vector<16x256xf32> to vector<256xf32>
    %98 = vector.shape_cast %97 : vector<256xf32> to vector<1x256xf32>
    %cst_48 = arith.constant 6.250000e-02 : f32
    %99 = vector.broadcast %cst_48 : f32 to vector<1x256xf32>
    %100 = arith.mulf %95, %99 : vector<1x256xf32>
    %cst_49 = arith.constant 6.250000e-02 : f32
    %101 = vector.broadcast %cst_49 : f32 to vector<1x256xf32>
    %102 = arith.mulf %98, %101 : vector<1x256xf32>
    %103 = arith.mulf %100, %100 : vector<1x256xf32>
    %104 = arith.subf %102, %103 : vector<1x256xf32>
    %cst_50 = arith.constant 0.000000e+00 : f32
    %105 = vector.broadcast %cst_50 : f32 to vector<1x256xf32>
    %106 = arith.maximumf %104, %105 : vector<1x256xf32>
    %cst_51 = arith.constant 9.99999974E-6 : f32
    %107 = vector.broadcast %cst_51 : f32 to vector<1x256xf32>
    %108 = arith.addf %106, %107 : vector<1x256xf32>
    %109 = math.rsqrt %108 : vector<1x256xf32>
    %c3_52 = arith.constant 3 : index
    %c0_53 = arith.constant 0 : index
    %110 = vector.load %arg2[%c3_52, %c0_53] : memref<8x256xf32, #tpu.memory_space<vmem>>, vector<1x256xf32>
    %111 = arith.mulf %110, %109 : vector<1x256xf32>
    %c3_54 = arith.constant 3 : index
    %c0_55 = arith.constant 0 : index
    %112 = vector.load %arg3[%c3_54, %c0_55] : memref<8x256xf32, #tpu.memory_space<vmem>>, vector<1x256xf32>
    %113 = arith.mulf %100, %111 : vector<1x256xf32>
    %114 = arith.subf %112, %113 : vector<1x256xf32>
    %115 = vector.broadcast %111 : vector<1x256xf32> to vector<16x256xf32>
    %116 = arith.mulf %93, %115 : vector<16x256xf32>
    %117 = vector.broadcast %114 : vector<1x256xf32> to vector<16x256xf32>
    %118 = arith.addf %116, %117 : vector<16x256xf32>
    %cst_56 = arith.constant 0.000000e+00 : f32
    %119 = vector.broadcast %cst_56 : f32 to vector<16x256xf32>
    %120 = arith.maximumf %118, %119 : vector<16x256xf32>
    %c4 = arith.constant 4 : index
    %c0_57 = arith.constant 0 : index
    %c0_58 = arith.constant 0 : index
    %121 = vector.load %arg1[%c4, %c0_57, %c0_58] : memref<8x256x256xf32, #tpu.memory_space<vmem>>, vector<1x256x256xf32>
    %122 = vector.shape_cast %121 : vector<1x256x256xf32> to vector<256x256xf32>
    %cst_59 = arith.constant dense<0.000000e+00> : vector<16x256xf32>
    %123 = tpu.matmul %120, %122, %cst_59 {dimension_numbers = #tpu.dot_dimension_numbers<[1], [0], [0], [1], [0, 0, 1, 1], [], []>} : vector<16x256xf32>, vector<256x256xf32>, vector<16x256xf32> -> vector<16x256xf32>
    %cst_60 = arith.constant dense<0.000000e+00> : vector<256xf32>
    %124 = vector.multi_reduction <add>, %123, %cst_60 [0] : vector<16x256xf32> to vector<256xf32>
    %125 = vector.shape_cast %124 : vector<256xf32> to vector<1x256xf32>
    %126 = arith.mulf %123, %123 : vector<16x256xf32>
    %cst_61 = arith.constant dense<0.000000e+00> : vector<256xf32>
    %127 = vector.multi_reduction <add>, %126, %cst_61 [0] : vector<16x256xf32> to vector<256xf32>
    %128 = vector.shape_cast %127 : vector<256xf32> to vector<1x256xf32>
    %cst_62 = arith.constant 6.250000e-02 : f32
    %129 = vector.broadcast %cst_62 : f32 to vector<1x256xf32>
    %130 = arith.mulf %125, %129 : vector<1x256xf32>
    %cst_63 = arith.constant 6.250000e-02 : f32
    %131 = vector.broadcast %cst_63 : f32 to vector<1x256xf32>
    %132 = arith.mulf %128, %131 : vector<1x256xf32>
    %133 = arith.mulf %130, %130 : vector<1x256xf32>
    %134 = arith.subf %132, %133 : vector<1x256xf32>
    %cst_64 = arith.constant 0.000000e+00 : f32
    %135 = vector.broadcast %cst_64 : f32 to vector<1x256xf32>
    %136 = arith.maximumf %134, %135 : vector<1x256xf32>
    %cst_65 = arith.constant 9.99999974E-6 : f32
    %137 = vector.broadcast %cst_65 : f32 to vector<1x256xf32>
    %138 = arith.addf %136, %137 : vector<1x256xf32>
    %139 = math.rsqrt %138 : vector<1x256xf32>
    %c4_66 = arith.constant 4 : index
    %c0_67 = arith.constant 0 : index
    %140 = vector.load %arg2[%c4_66, %c0_67] : memref<8x256xf32, #tpu.memory_space<vmem>>, vector<1x256xf32>
    %141 = arith.mulf %140, %139 : vector<1x256xf32>
    %c4_68 = arith.constant 4 : index
    %c0_69 = arith.constant 0 : index
    %142 = vector.load %arg3[%c4_68, %c0_69] : memref<8x256xf32, #tpu.memory_space<vmem>>, vector<1x256xf32>
    %143 = arith.mulf %130, %141 : vector<1x256xf32>
    %144 = arith.subf %142, %143 : vector<1x256xf32>
    %145 = vector.broadcast %141 : vector<1x256xf32> to vector<16x256xf32>
    %146 = arith.mulf %123, %145 : vector<16x256xf32>
    %147 = vector.broadcast %144 : vector<1x256xf32> to vector<16x256xf32>
    %148 = arith.addf %146, %147 : vector<16x256xf32>
    %cst_70 = arith.constant 0.000000e+00 : f32
    %149 = vector.broadcast %cst_70 : f32 to vector<16x256xf32>
    %150 = arith.maximumf %148, %149 : vector<16x256xf32>
    %c5 = arith.constant 5 : index
    %c0_71 = arith.constant 0 : index
    %c0_72 = arith.constant 0 : index
    %151 = vector.load %arg1[%c5, %c0_71, %c0_72] : memref<8x256x256xf32, #tpu.memory_space<vmem>>, vector<1x256x256xf32>
    %152 = vector.shape_cast %151 : vector<1x256x256xf32> to vector<256x256xf32>
    %cst_73 = arith.constant dense<0.000000e+00> : vector<16x256xf32>
    %153 = tpu.matmul %150, %152, %cst_73 {dimension_numbers = #tpu.dot_dimension_numbers<[1], [0], [0], [1], [0, 0, 1, 1], [], []>} : vector<16x256xf32>, vector<256x256xf32>, vector<16x256xf32> -> vector<16x256xf32>
    %cst_74 = arith.constant dense<0.000000e+00> : vector<256xf32>
    %154 = vector.multi_reduction <add>, %153, %cst_74 [0] : vector<16x256xf32> to vector<256xf32>
    %155 = vector.shape_cast %154 : vector<256xf32> to vector<1x256xf32>
    %156 = arith.mulf %153, %153 : vector<16x256xf32>
    %cst_75 = arith.constant dense<0.000000e+00> : vector<256xf32>
    %157 = vector.multi_reduction <add>, %156, %cst_75 [0] : vector<16x256xf32> to vector<256xf32>
    %158 = vector.shape_cast %157 : vector<256xf32> to vector<1x256xf32>
    %cst_76 = arith.constant 6.250000e-02 : f32
    %159 = vector.broadcast %cst_76 : f32 to vector<1x256xf32>
    %160 = arith.mulf %155, %159 : vector<1x256xf32>
    %cst_77 = arith.constant 6.250000e-02 : f32
    %161 = vector.broadcast %cst_77 : f32 to vector<1x256xf32>
    %162 = arith.mulf %158, %161 : vector<1x256xf32>
    %163 = arith.mulf %160, %160 : vector<1x256xf32>
    %164 = arith.subf %162, %163 : vector<1x256xf32>
    %cst_78 = arith.constant 0.000000e+00 : f32
    %165 = vector.broadcast %cst_78 : f32 to vector<1x256xf32>
    %166 = arith.maximumf %164, %165 : vector<1x256xf32>
    %cst_79 = arith.constant 9.99999974E-6 : f32
    %167 = vector.broadcast %cst_79 : f32 to vector<1x256xf32>
    %168 = arith.addf %166, %167 : vector<1x256xf32>
    %169 = math.rsqrt %168 : vector<1x256xf32>
    %c5_80 = arith.constant 5 : index
    %c0_81 = arith.constant 0 : index
    %170 = vector.load %arg2[%c5_80, %c0_81] : memref<8x256xf32, #tpu.memory_space<vmem>>, vector<1x256xf32>
    %171 = arith.mulf %170, %169 : vector<1x256xf32>
    %c5_82 = arith.constant 5 : index
    %c0_83 = arith.constant 0 : index
    %172 = vector.load %arg3[%c5_82, %c0_83] : memref<8x256xf32, #tpu.memory_space<vmem>>, vector<1x256xf32>
    %173 = arith.mulf %160, %171 : vector<1x256xf32>
    %174 = arith.subf %172, %173 : vector<1x256xf32>
    %175 = vector.broadcast %171 : vector<1x256xf32> to vector<16x256xf32>
    %176 = arith.mulf %153, %175 : vector<16x256xf32>
    %177 = vector.broadcast %174 : vector<1x256xf32> to vector<16x256xf32>
    %178 = arith.addf %176, %177 : vector<16x256xf32>
    %cst_84 = arith.constant 0.000000e+00 : f32
    %179 = vector.broadcast %cst_84 : f32 to vector<16x256xf32>
    %180 = arith.maximumf %178, %179 : vector<16x256xf32>
    %c6 = arith.constant 6 : index
    %c0_85 = arith.constant 0 : index
    %c0_86 = arith.constant 0 : index
    %181 = vector.load %arg1[%c6, %c0_85, %c0_86] : memref<8x256x256xf32, #tpu.memory_space<vmem>>, vector<1x256x256xf32>
    %182 = vector.shape_cast %181 : vector<1x256x256xf32> to vector<256x256xf32>
    %cst_87 = arith.constant dense<0.000000e+00> : vector<16x256xf32>
    %183 = tpu.matmul %180, %182, %cst_87 {dimension_numbers = #tpu.dot_dimension_numbers<[1], [0], [0], [1], [0, 0, 1, 1], [], []>} : vector<16x256xf32>, vector<256x256xf32>, vector<16x256xf32> -> vector<16x256xf32>
    %cst_88 = arith.constant dense<0.000000e+00> : vector<256xf32>
    %184 = vector.multi_reduction <add>, %183, %cst_88 [0] : vector<16x256xf32> to vector<256xf32>
    %185 = vector.shape_cast %184 : vector<256xf32> to vector<1x256xf32>
    %186 = arith.mulf %183, %183 : vector<16x256xf32>
    %cst_89 = arith.constant dense<0.000000e+00> : vector<256xf32>
    %187 = vector.multi_reduction <add>, %186, %cst_89 [0] : vector<16x256xf32> to vector<256xf32>
    %188 = vector.shape_cast %187 : vector<256xf32> to vector<1x256xf32>
    %cst_90 = arith.constant 6.250000e-02 : f32
    %189 = vector.broadcast %cst_90 : f32 to vector<1x256xf32>
    %190 = arith.mulf %185, %189 : vector<1x256xf32>
    %cst_91 = arith.constant 6.250000e-02 : f32
    %191 = vector.broadcast %cst_91 : f32 to vector<1x256xf32>
    %192 = arith.mulf %188, %191 : vector<1x256xf32>
    %193 = arith.mulf %190, %190 : vector<1x256xf32>
    %194 = arith.subf %192, %193 : vector<1x256xf32>
    %cst_92 = arith.constant 0.000000e+00 : f32
    %195 = vector.broadcast %cst_92 : f32 to vector<1x256xf32>
    %196 = arith.maximumf %194, %195 : vector<1x256xf32>
    %cst_93 = arith.constant 9.99999974E-6 : f32
    %197 = vector.broadcast %cst_93 : f32 to vector<1x256xf32>
    %198 = arith.addf %196, %197 : vector<1x256xf32>
    %199 = math.rsqrt %198 : vector<1x256xf32>
    %c6_94 = arith.constant 6 : index
    %c0_95 = arith.constant 0 : index
    %200 = vector.load %arg2[%c6_94, %c0_95] : memref<8x256xf32, #tpu.memory_space<vmem>>, vector<1x256xf32>
    %201 = arith.mulf %200, %199 : vector<1x256xf32>
    %c6_96 = arith.constant 6 : index
    %c0_97 = arith.constant 0 : index
    %202 = vector.load %arg3[%c6_96, %c0_97] : memref<8x256xf32, #tpu.memory_space<vmem>>, vector<1x256xf32>
    %203 = arith.mulf %190, %201 : vector<1x256xf32>
    %204 = arith.subf %202, %203 : vector<1x256xf32>
    %205 = vector.broadcast %201 : vector<1x256xf32> to vector<16x256xf32>
    %206 = arith.mulf %183, %205 : vector<16x256xf32>
    %207 = vector.broadcast %204 : vector<1x256xf32> to vector<16x256xf32>
    %208 = arith.addf %206, %207 : vector<16x256xf32>
    %cst_98 = arith.constant 0.000000e+00 : f32
    %209 = vector.broadcast %cst_98 : f32 to vector<16x256xf32>
    %210 = arith.maximumf %208, %209 : vector<16x256xf32>
    %c7 = arith.constant 7 : index
    %c0_99 = arith.constant 0 : index
    %c0_100 = arith.constant 0 : index
    %211 = vector.load %arg1[%c7, %c0_99, %c0_100] : memref<8x256x256xf32, #tpu.memory_space<vmem>>, vector<1x1x256xf32>
    %212 = vector.shape_cast %211 : vector<1x1x256xf32> to vector<1x256xf32>
    %c7_101 = arith.constant 7 : index
    %c0_102 = arith.constant 0 : index
    %213 = vector.load %arg3[%c7_101, %c0_102] : memref<8x256xf32, #tpu.memory_space<vmem>>, vector<1x1xf32>
    %214 = vector.broadcast %212 : vector<1x256xf32> to vector<16x256xf32>
    %215 = arith.mulf %210, %214 : vector<16x256xf32>
    %cst_103 = arith.constant dense<0.000000e+00> : vector<16xf32>
    %216 = vector.multi_reduction <add>, %215, %cst_103 [1] : vector<16x256xf32> to vector<16xf32>
    %217 = vector.shape_cast %216 : vector<16xf32> to vector<16x1xf32>
    %218 = vector.broadcast %213 : vector<1x1xf32> to vector<16x1xf32>
    %219 = arith.addf %217, %218 : vector<16x1xf32>
    %c0_104 = arith.constant 0 : index
    %c0_105 = arith.constant 0 : index
    %220 = vector.load %arg4[%c0_104, %c0_105] : memref<16x1xf32, #tpu.memory_space<vmem>>, vector<16x1xf32>
    tpu.vector_store %arg4[%c0_104, %c0_105], %219 {strides = array<i32>} : memref<16x1xf32, #tpu.memory_space<vmem>>, vector<16x1xf32>,
    return
  }
}

</mosaic_0001>

<llo_original>
// kernel: tpu_custom_call.1
$region0: #{tpu_custom_call.1}
  #allocation0 [shape = 'u32[]', space=smem, size = 0x4, offset = 0x4, fixed_abs, tag = 'smem constant byte address 0x4 - core index']
  #allocation1 [shape = 'u32[144,128]{1,0:T(1,128)}', space=vmem, size = 0x12000, scoped, tag = 'internal scratch']
  %s0 = inlined_call_operand.hbm [shape: f32[16,256], index: 0, kind: input, shape index: {}]
  %s1 = inlined_call_operand.hbm [shape: f32[8,256,256], index: 1, kind: input, shape index: {}]
  %s2 = inlined_call_operand.hbm [shape: f32[8,256], index: 2, kind: input, shape index: {}]
  %s3 = inlined_call_operand.hbm [shape: f32[8,256], index: 3, kind: input, shape index: {}]
  %s4 = inlined_call_operand.vmem [shape: f32[16,1], index: 4, kind: output, shape index: {}]
  %s5 = sld [smem:[#allocation0]]
  $region42: #{tpu_custom_call.1} parent=0
    _
  %s7 = ssub.s32 1, %s5
  %s8 = scalar_select 0, %s7, %s5
  $region1: #{tpu_custom_call.1} parent=0
    #allocation2 [shape = 'u8[16384]{0}', space=vmem, size = 0x4000, scoped, tag = 'input window, operand 0, single buffered']
    #allocation3 [shape = 's32[1]{0}', space=sflag, size = 0x4, scoped, tag = 'scoped memory for tpu_custom_call.1']
    #allocation4 [shape = 'u8[2097152]{0}', space=vmem, size = 0x200000, scoped, tag = 'input window, operand 1, single buffered']
    #allocation5 [shape = 's32[1]{0}', space=sflag, size = 0x4, scoped, tag = 'scoped memory for tpu_custom_call.1']
    #allocation6 [shape = 'u8[8192]{0}', space=vmem, size = 0x2000, scoped, tag = 'input window, operand 2, single buffered']
    #allocation7 [shape = 'u8[8192]{0}', space=vmem, size = 0x2000, scoped, tag = 'input window, operand 3, single buffered']
    #allocation8 [shape = 's32[1]{0}', space=sflag, size = 0x4, scoped, tag = 'scoped memory for tpu_custom_call.1']
    %9 = vsyncpa [#allocation3], 0
    %10 = vsyncpa [#allocation5], 0
    %11 = vsyncpa [#allocation8], 0
    // Predicated region
    $region2: #{tpu_custom_call.1} parent=1 // pred_check
      _
    $region3: #{tpu_custom_call.1} parent=1 // pred_check_branch
      %13 = sbr.rel (0) target = $region5
    $region4: #{tpu_custom_call.1} parent=1 // pred_region
      %s15 = ssub.s32 512, 512
      %16 = vsyncadd [#allocation3], %s15
      %s17 = sshll.u32 [#allocation2], 4
      %s18 = int_to_ptr.vmem [resolvable:$true] %s17
      %23 = dma.hbm_to_vmem [thread:$0]  %s0, 512, %s18, [#allocation3], 256, 256, 16
    $region5: #{tpu_custom_call.1} parent=1 // pred_fallthru
      _
    // Predicated region
    $region6: #{tpu_custom_call.1} parent=1 // pred_check
      _
    $region7: #{tpu_custom_call.1} parent=1 // pred_check_branch
      %25 = sbr.rel (0) target = $region9
    $region8: #{tpu_custom_call.1} parent=1 // pred_region
      %s27 = ssub.s32 65536, 65536
      %28 = vsyncadd [#allocation5], %s27
      %s29 = sshll.u32 [#allocation4], 4
      %s30 = int_to_ptr.vmem [resolvable:$true] %s29
      %35 = dma.hbm_to_vmem [thread:$0]  %s1, 65536, %s30, [#allocation5], 256, 256, 16
    $region9: #{tpu_custom_call.1} parent=1 // pred_fallthru
      _
    // Predicated region
    $region10: #{tpu_custom_call.1} parent=1 // pred_check
      _
    $region11: #{tpu_custom_call.1} parent=1 // pred_check_branch
      %37 = sbr.rel (0) target = $region13
    $region12: #{tpu_custom_call.1} parent=1 // pred_region
      %s39 = ssub.s32 256, 256
      %40 = vsyncadd [#allocation5], %s39
      %s42 = sshll.u32 [#allocation6], 4
      %s43 = int_to_ptr.vmem [resolvable:$true] %s42
      %45 = dma.hbm_to_vmem [thread:$0]  %s2, 256, %s43, [#allocation5]
    $region13: #{tpu_custom_call.1} parent=1 // pred_fallthru
      _
    // Predicated region
    $region14: #{tpu_custom_call.1} parent=1 // pred_check
      _
    $region15: #{tpu_custom_call.1} parent=1 // pred_check_branch
      %47 = sbr.rel (0) target = $region17
    $region16: #{tpu_custom_call.1} parent=1 // pred_region
      %s49 = ssub.s32 256, 256
      %50 = vsyncadd [#allocation8], %s49
      %s52 = sshll.u32 [#allocation7], 4
      %s53 = int_to_ptr.vmem [resolvable:$true] %s52
      %55 = dma.hbm_to_vmem [thread:$0]  %s3, 256, %s53, [#allocation8]
    $region17: #{tpu_custom_call.1} parent=1 // pred_fallthru
      _
    // Predicated region
    $region18: #{tpu_custom_call.1} parent=1 // pred_check
      _
    $region19: #{tpu_custom_call.1} parent=1 // pred_check_branch
      %57 = sbr.rel (0) target = $region21
    $region20: #{tpu_custom_call.1} parent=1 // pred_region
      %58 = dma.done [#allocation3], 512
    $region21: #{tpu_custom_call.1} parent=1 // pred_fallthru
      _
    // Predicated region
    $region22: #{tpu_custom_call.1} parent=1 // pred_check
      _
    $region23: #{tpu_custom_call.1} parent=1 // pred_check_branch
      %60 = sbr.rel (0) target = $region25
    $region24: #{tpu_custom_call.1} parent=1 // pred_region
      %61 = dma.done [#allocation5], 65536
    $region25: #{tpu_custom_call.1} parent=1 // pred_fallthru
      _
    // Predicated region
    $region26: #{tpu_custom_call.1} parent=1 // pred_check
      _
    $region27: #{tpu_custom_call.1} parent=1 // pred_check_branch
      %63 = sbr.rel (0) target = $region29
    $region28: #{tpu_custom_call.1} parent=1 // pred_region
      %64 = dma.done [#allocation5], 256
    $region29: #{tpu_custom_call.1} parent=1 // pred_fallthru
      _
    // Predicated region
    $region30: #{tpu_custom_call.1} parent=1 // pred_check
      _
    $region31: #{tpu_custom_call.1} parent=1 // pred_check_branch
      %66 = sbr.rel (0) target = $region33
    $region32: #{tpu_custom_call.1} parent=1 // pred_region
      %67 = dma.done [#allocation8], 256
    $region33: #{tpu_custom_call.1} parent=1 // pred_fallthru
      _
    %v68 = vld [vmem:[#allocation2] sm:$0xff]
    %v69 = vld [vmem:[#allocation2 + $0x8] sm:$0xff]
    %v70 = vld [vmem:[#allocation2 + $0x10] sm:$0xff]
    %v71 = vld [vmem:[#allocation2 + $0x18] sm:$0xff]
    %v72 = vld [vmem:[#allocation4] sm:$0xff]
    %v73 = vld [vmem:[#allocation4 + $0x8] sm:$0xff]
    %v74 = vld [vmem:[#allocation4 + $0x10] sm:$0xff]
    %v75 = vld [vmem:[#allocation4 + $0x18] sm:$0xff]
    %v76 = vld [vmem:[#allocation4 + $0x20] sm:$0xff]
    %v77 = vld [vmem:[#allocation4 + $0x28] sm:$0xff]
    %v78 = vld [vmem:[#allocation4 + $0x30] sm:$0xff]
    %v79 = vld [vmem:[#allocation4 + $0x38] sm:$0xff]
    %v80 = vld [vmem:[#allocation4 + $0x40] sm:$0xff]
    %v81 = vld [vmem:[#allocation4 + $0x48] sm:$0xff]
    %v82 = vld [vmem:[#allocation4 + $0x50] sm:$0xff]
    %v83 = vld [vmem:[#allocation4 + $0x58] sm:$0xff]
    %v84 = vld [vmem:[#allocation4 + $0x60] sm:$0xff]
    %v85 = vld [vmem:[#allocation4 + $0x68] sm:$0xff]
    %v86 = vld [vmem:[#allocation4 + $0x70] sm:$0xff]
    %v87 = vld [vmem:[#allocation4 + $0x78] sm:$0xff]
    %v88 = vld [vmem:[#allocation4 + $0x80] sm:$0xff]
    %v89 = vld [vmem:[#allocation4 + $0x88] sm:$0xff]
    %v90 = vld [vmem:[#allocation4 + $0x90] sm:$0xff]
    %v91 = vld [vmem:[#allocation4 + $0x98] sm:$0xff]
    %v92 = vld [vmem:[#allocation4 + $0xa0] sm:$0xff]
    %v93 = vld [vmem:[#allocation4 + $0xa8] sm:$0xff]
    %v94 = vld [vmem:[#allocation4 + $0xb0] sm:$0xff]
    %v95 = vld [vmem:[#allocation4 + $0xb8] sm:$0xff]
    %v96 = vld [vmem:[#allocation4 + $0xc0] sm:$0xff]
    %v97 = vld [vmem:[#allocation4 + $0xc8] sm:$0xff]
    %v98 = vld [vmem:[#allocation4 + $0xd0] sm:$0xff]
    %v99 = vld [vmem:[#allocation4 + $0xd8] sm:$0xff]
    %v100 = vld [vmem:[#allocation4 + $0xe0] sm:$0xff]
    %v101 = vld [vmem:[#allocation4 + $0xe8] sm:$0xff]
    %v102 = vld [vmem:[#allocation4 + $0xf0] sm:$0xff]
    %v103 = vld [vmem:[#allocation4 + $0xf8] sm:$0xff]
    %v104 = vld [vmem:[#allocation4 + $0x100] sm:$0xff]
    %v105 = vld [vmem:[#allocation4 + $0x108] sm:$0xff]
    %v106 = vld [vmem:[#allocation4 + $0x110] sm:$0xff]
    %v107 = vld [vmem:[#allocation4 + $0x118] sm:$0xff]
    %v108 = vld [vmem:[#allocation4 + $0x120] sm:$0xff]
    %v109 = vld [vmem:[#allocation4 + $0x128] sm:$0xff]
    %v110 = vld [vmem:[#allocation4 + $0x130] sm:$0xff]
    %v111 = vld [vmem:[#allocation4 + $0x138] sm:$0xff]
    %v112 = vld [vmem:[#allocation4 + $0x140] sm:$0xff]
    %v113 = vld [vmem:[#allocation4 + $0x148] sm:$0xff]
    %v114 = vld [vmem:[#allocation4 + $0x150] sm:$0xff]
    %v115 = vld [vmem:[#allocation4 + $0x158] sm:$0xff]
    %v116 = vld [vmem:[#allocation4 + $0x160] sm:$0xff]
    %v117 = vld [vmem:[#allocation4 + $0x168] sm:$0xff]
    %v118 = vld [vmem:[#allocation4 + $0x170] sm:$0xff]
    %v119 = vld [vmem:[#allocation4 + $0x178] sm:$0xff]
    %v120 = vld [vmem:[#allocation4 + $0x180] sm:$0xff]
    %v121 = vld [vmem:[#allocation4 + $0x188] sm:$0xff]
    %v122 = vld [vmem:[#allocation4 + $0x190] sm:$0xff]
    %v123 = vld [vmem:[#allocation4 + $0x198] sm:$0xff]
    %v124 = vld [vmem:[#allocation4 + $0x1a0] sm:$0xff]
    %v125 = vld [vmem:[#allocation4 + $0x1a8] sm:$0xff]
    %v126 = vld [vmem:[#allocation4 + $0x1b0] sm:$0xff]
    %v127 = vld [vmem:[#allocation4 + $0x1b8] sm:$0xff]
    %v128 = vld [vmem:[#allocation4 + $0x1c0] sm:$0xff]
    %v129 = vld [vmem:[#allocation4 + $0x1c8] sm:$0xff]
    %v130 = vld [vmem:[#allocation4 + $0x1d0] sm:$0xff]
    %v131 = vld [vmem:[#allocation4 + $0x1d8] sm:$0xff]
    %v132 = vld [vmem:[#allocation4 + $0x1e0] sm:$0xff]
    %v133 = vld [vmem:[#allocation4 + $0x1e8] sm:$0xff]
    %v134 = vld [vmem:[#allocation4 + $0x1f0] sm:$0xff]
    %v135 = vld [vmem:[#allocation4 + $0x1f8] sm:$0xff]
    %136 = vmatprep.subr.mxu0 %v73
    %137 = vmatpush1.msra.mxu0 %v72
    %138 = vmatprep.subr.mxu0 %v75
    %139 = vmatpush1.msra.mxu0 %v74
    %140 = vmatprep.subr.mxu0 %v77
    %141 = vmatpush1.msra.mxu0 %v76
    %142 = vmatprep.subr.mxu0 %v79
    %143 = vmatpush1.msra.mxu0 %v78
    %144 = vmatprep.subr.mxu0 %v81
    %145 = vmatpush1.msra.mxu0 %v80
    %146 = vmatprep.subr.mxu0 %v83
    %147 = vmatpush1.msra.mxu0 %v82
    %148 = vmatprep.subr.mxu0 %v85
    %149 = vmatpush1.msra.mxu0 %v84
    %150 = vmatprep.subr.mxu0 %v87
    %151 = vmatpush1.msra.mxu0 %v86
    %152 = vmatprep.subr.mxu0 %v89
    %153 = vmatpush1.msra.mxu0 %v88
    %154 = vmatprep.subr.mxu0 %v91
    %155 = vmatpush1.msra.mxu0 %v90
    %156 = vmatprep.subr.mxu0 %v93
    %157 = vmatpush1.msra.mxu0 %v92
    %158 = vmatprep.subr.mxu0 %v95
    %159 = vmatpush1.msra.mxu0 %v94
    %160 = vmatprep.subr.mxu0 %v97
    %161 = vmatpush1.msra.mxu0 %v96
    %162 = vmatprep.subr.mxu0 %v99
    %163 = vmatpush1.msra.mxu0 %v98
    %164 = vmatprep.subr.mxu0 %v101
    %165 = vmatpush1.msra.mxu0 %v100
    %166 = vmatprep.subr.mxu0 %v103
    %167 = vmatpush1.msra.mxu0 %v102
    %168 = vmatprep.subr.mxu0 %v105
    %169 = vmatpush1.msra.mxu0 %v104
    %170 = vmatprep.subr.mxu0 %v107
    %171 = vmatpush1.msra.mxu0 %v106
    %172 = vmatprep.subr.mxu0 %v109
    %173 = vmatpush1.msra.mxu0 %v108
    %174 = vmatprep.subr.mxu0 %v111
    %175 = vmatpush1.msra.mxu0 %v110
    %176 = vmatprep.subr.mxu0 %v113
    %177 = vmatpush1.msra.mxu0 %v112
    %178 = vmatprep.subr.mxu0 %v115
    %179 = vmatpush1.msra.mxu0 %v114
    %180 = vmatprep.subr.mxu0 %v117
    %181 = vmatpush1.msra.mxu0 %v116
    %182 = vmatprep.subr.mxu0 %v119
    %183 = vmatpush1.msra.mxu0 %v118
    %184 = vmatprep.subr.mxu0 %v121
    %185 = vmatpush1.msra.mxu0 %v120
    %186 = vmatprep.subr.mxu0 %v123
    %187 = vmatpush1.msra.mxu0 %v122
    %188 = vmatprep.subr.mxu0 %v125
    %189 = vmatpush1.msra.mxu0 %v124
    %190 = vmatprep.subr.mxu0 %v127
    %191 = vmatpush1.msra.mxu0 %v126
    %192 = vmatprep.subr.mxu0 %v129
    %193 = vmatpush1.msra.mxu0 %v128
    %194 = vmatprep.subr.mxu0 %v131
    %195 = vmatpush1.msra.mxu0 %v130
    %196 = vmatprep.subr.mxu0 %v133
    %197 = vmatpush1.msra.mxu0 %v132
    %198 = vmatprep.subr.mxu0 %v135
    %199 = vmatpush1.msra.mxu0 %v134
    %200 = vmatprep.mubr.f32.mxu0 %v69
    %201 = vmatmul.mubr.f32.gmra.mrb[0].mxu0 %v68
    %v202 = vpop.f32.mrb[0].mxu0
    %v203 = vadd.f32 0.0, %v202
    %v204 = vpop.f32.mrb[0].mxu0
    %v205 = vadd.f32 0.0, %v204
    %206 = vmatprep.mubr.f32.mxu0 %v71
    %207 = vmatmul.mubr.f32.gmra.mrb[0].mxu0 %v70
    %v208 = vpop.f32.mrb[0].mxu0
    %v209 = vadd.f32 0.0, %v208
    %v210 = vpop.f32.mrb[0].mxu0
    %v211 = vadd.f32 0.0, %v210
    %212 = vdwg.mxu0
    %v213 = vadd.f32 %v203, %v209
    %v214 = vrot.slane %v213, 4
    %v215 = vadd.f32 %v213, %v214
    %v216 = vrot.slane %v215, 2
    %v217 = vadd.f32 %v215, %v216
    %v218 = vrot.slane %v217, 1
    %v219 = vadd.f32 %v217, %v218
    %v220 = vadd.f32 %v205, %v211
    %v221 = vrot.slane %v220, 4
    %v222 = vadd.f32 %v220, %v221
    %v223 = vrot.slane %v222, 2
    %v224 = vadd.f32 %v222, %v223
    %v225 = vrot.slane %v224, 1
    %v226 = vadd.f32 %v224, %v225
    %v227 = vmul.f32 %v203, %v203
    %v228 = vmul.f32 %v205, %v205
    %v229 = vmul.f32 %v209, %v209
    %v230 = vmul.f32 %v211, %v211
    %v231 = vadd.f32 %v227, %v229
    %v232 = vrot.slane %v231, 4
    %v233 = vadd.f32 %v231, %v232
    %v234 = vrot.slane %v233, 2
    %v235 = vadd.f32 %v233, %v234
    %v236 = vrot.slane %v235, 1
    %v237 = vadd.f32 %v235, %v236
    %v238 = vadd.f32 %v228, %v230
    %v239 = vrot.slane %v238, 4
    %v240 = vadd.f32 %v238, %v239
    %v241 = vrot.slane %v240, 2
    %v242 = vadd.f32 %v240, %v241
    %v243 = vrot.slane %v242, 1
    %v244 = vadd.f32 %v242, %v243
    %v245 = vmul.f32 %v219, 0.0625
    %v246 = vmul.f32 %v226, 0.0625
    %v247 = vmul.f32 %v237, 0.0625
    %v248 = vmul.f32 %v244, 0.0625
    %v249 = vmul.f32 %v245, %v245
    %v250 = vmul.f32 %v246, %v246
    %v251 = vsub.f32 %v247, %v249
    %v252 = vsub.f32 %v248, %v250
    %v253 = vmax.f32 %v251, 0.0
    %v254 = vmax.f32 %v252, 0.0
    %v255 = vadd.f32 %v253, 1e-05
    %v256 = vadd.f32 %v254, 1e-05
    %v257 = vrsqrt.pop %v255
    %v258 = vrsqrt.pop %v256
    %v259 = vld [vmem:[#allocation6] ss:$8 sm:$0x3]
    %v262 = vcombine.low %v257, %v258
    %v264 = vunpack.c.l.s4 1966171168
    %v265 = vunpack.c.0.s8 %v264
    %v266 = vlaneseq
    %v267 = vshrl.u32 %v266, 7
    %v268 = vsub.s32 %v265, %v267
    %v269 = vrot.slane %v262, %v268
    %v271 = vunpack.c.l.s4 1966171168
    %v272 = vunpack.c.0.s8 %v271
    %v273 = vlaneseq
    %v274 = vshrl.u32 %v273, 7
    %v275 = vsub.s32 %v272, %v274
    %v276 = vrot.slane %v269, %v275
    %v278 = vmul.f32 %v259, %v276
    %v279 = vld [vmem:[#allocation7] ss:$8 sm:$0x3]
    %v281 = vlaneseq
    %v282 = vshrl.u32 %v281, 7
    %v283 = vsub.s32 0, %v282
    %v284 = vrot.slane %v278, %v283
    %v285 = vlaneseq
    %v286 = vshrl.u32 %v285, 7
    %v287 = vsub.s32 1, %v286
    %v288 = vrot.slane %v278, %v287
    %v291 = vmul.f32 %v245, %v284
    %v292 = vmul.f32 %v246, %v288
    %v295 = vcombine.low %v291, %v292
    %v297 = vunpack.c.l.s4 1966171168
    %v298 = vunpack.c.0.s8 %v297
    %v299 = vlaneseq
    %v300 = vshrl.u32 %v299, 7
    %v301 = vsub.s32 %v298, %v300
    %v302 = vrot.slane %v295, %v301
    %v304 = vunpack.c.l.s4 1966171168
    %v305 = vunpack.c.0.s8 %v304
    %v306 = vlaneseq
    %v307 = vshrl.u32 %v306, 7
    %v308 = vsub.s32 %v305, %v307
    %v309 = vrot.slane %v302, %v308
    %v311 = vsub.f32 %v279, %v309
    %v312 = vmul.f32 %v203, %v284
    %v313 = vmul.f32 %v205, %v288
    %v314 = vmul.f32 %v209, %v284
    %v315 = vmul.f32 %v211, %v288
    %v317 = vlaneseq
    %v318 = vshrl.u32 %v317, 7
    %v319 = vsub.s32 0, %v318
    %v320 = vrot.slane %v311, %v319
    %v321 = vlaneseq
    %v322 = vshrl.u32 %v321, 7
    %v323 = vsub.s32 1, %v322
    %v324 = vrot.slane %v311, %v323
    %v327 = vadd.f32 %v312, %v320
    %v328 = vadd.f32 %v313, %v324
    %v329 = vadd.f32 %v314, %v320
    %v330 = vadd.f32 %v315, %v324
    %v331 = vmax.f32 %v327, 0.0
    %v332 = vmax.f32 %v328, 0.0
    %v333 = vmax.f32 %v329, 0.0
    %v334 = vmax.f32 %v330, 0.0
    %s335 = scalar_lea.vmem [#allocation4], 512
    %v336 = vld [vmem:[%s335] sm:$0xff]
    %v337 = vld [vmem:[%s335 + $0x8] sm:$0xff]
    %v338 = vld [vmem:[%s335 + $0x10] sm:$0xff]
    %v339 = vld [vmem:[%s335 + $0x18] sm:$0xff]
    %v340 = vld [vmem:[%s335 + $0x20] sm:$0xff]
    %v341 = vld [vmem:[%s335 + $0x28] sm:$0xff]
    %v342 = vld [vmem:[%s335 + $0x30] sm:$0xff]
    %v343 = vld [vmem:[%s335 + $0x38] sm:$0xff]
    %v344 = vld [vmem:[%s335 + $0x40] sm:$0xff]
    %v345 = vld [vmem:[%s335 + $0x48] sm:$0xff]
    %v346 = vld [vmem:[%s335 + $0x50] sm:$0xff]
    %v347 = vld [vmem:[%s335 + $0x58] sm:$0xff]
    %v348 = vld [vmem:[%s335 + $0x60] sm:$0xff]
    %v349 = vld [vmem:[%s335 + $0x68] sm:$0xff]
    %v350 = vld [vmem:[%s335 + $0x70] sm:$0xff]
    %v351 = vld [vmem:[%s335 + $0x78] sm:$0xff]
    %v352 = vld [vmem:[%s335 + $0x80] sm:$0xff]
    %v353 = vld [vmem:[%s335 + $0x88] sm:$0xff]
    %v354 = vld [vmem:[%s335 + $0x90] sm:$0xff]
    %v355 = vld [vmem:[%s335 + $0x98] sm:$0xff]
    %v356 = vld [vmem:[%s335 + $0xa0] sm:$0xff]
    %v357 = vld [vmem:[%s335 + $0xa8] sm:$0xff]
    %v358 = vld [vmem:[%s335 + $0xb0] sm:$0xff]
    %v359 = vld [vmem:[%s335 + $0xb8] sm:$0xff]
    %v360 = vld [vmem:[%s335 + $0xc0] sm:$0xff]
    %v361 = vld [vmem:[%s335 + $0xc8] sm:$0xff]
    %v362 = vld [vmem:[%s335 + $0xd0] sm:$0xff]
    %v363 = vld [vmem:[%s335 + $0xd8] sm:$0xff]
    %v364 = vld [vmem:[%s335 + $0xe0] sm:$0xff]
    %v365 = vld [vmem:[%s335 + $0xe8] sm:$0xff]
    %v366 = vld [vmem:[%s335 + $0xf0] sm:$0xff]
    %v367 = vld [vmem:[%s335 + $0xf8] sm:$0xff]
    %v368 = vld [vmem:[%s335 + $0x100] sm:$0xff]
    %v369 = vld [vmem:[%s335 + $0x108] sm:$0xff]
    %v370 = vld [vmem:[%s335 + $0x110] sm:$0xff]
    %v371 = vld [vmem:[%s335 + $0x118] sm:$0xff]
    %v372 = vld [vmem:[%s335 + $0x120] sm:$0xff]
    %v373 = vld [vmem:[%s335 + $0x128] sm:$0xff]
    %v374 = vld [vmem:[%s335 + $0x130] sm:$0xff]
    %v375 = vld [vmem:[%s335 + $0x138] sm:$0xff]
    %v376 = vld [vmem:[%s335 + $0x140] sm:$0xff]
    %v377 = vld [vmem:[%s335 + $0x148] sm:$0xff]
    %v378 = vld [vmem:[%s335 + $0x150] sm:$0xff]
    %v379 = vld [vmem:[%s335 + $0x158] sm:$0xff]
    %v380 = vld [vmem:[%s335 + $0x160] sm:$0xff]
    %v381 = vld [vmem:[%s335 + $0x168] sm:$0xff]
    %v382 = vld [vmem:[%s335 + $0x170] sm:$0xff]
    %v383 = vld [vmem:[%s335 + $0x178] sm:$0xff]
    %v384 = vld [vmem:[%s335 + $0x180] sm:$0xff]
    %v385 = vld [vmem:[%s335 + $0x188] sm:$0xff]
    %v386 = vld [vmem:[%s335 + $0x190] sm:$0xff]
    %v387 = vld [vmem:[%s335 + $0x198] sm:$0xff]
    %v388 = vld [vmem:[%s335 + $0x1a0] sm:$0xff]
    %v389 = vld [vmem:[%s335 + $0x1a8] sm:$0xff]
    %v390 = vld [vmem:[%s335 + $0x1b0] sm:$0xff]
    %v391 = vld [vmem:[%s335 + $0x1b8] sm:$0xff]
    %v392 = vld [vmem:[%s335 + $0x1c0] sm:$0xff]
    %v393 = vld [vmem:[%s335 + $0x1c8] sm:$0xff]
    %v394 = vld [vmem:[%s335 + $0x1d0] sm:$0xff]
    %v395 = vld [vmem:[%s335 + $0x1d8] sm:$0xff]
    %v396 = vld [vmem:[%s335 + $0x1e0] sm:$0xff]
    %v397 = vld [vmem:[%s335 + $0x1e8] sm:$0xff]
    %v398 = vld [vmem:[%s335 + $0x1f0] sm:$0xff]
    %v399 = vld [vmem:[%s335 + $0x1f8] sm:$0xff]
    %400 = vmatprep.subr.mxu0 %v337
    %401 = vmatpush1.msra.mxu0 %v336
    %402 = vmatprep.subr.mxu0 %v339
    %403 = vmatpush1.msra.mxu0 %v338
    %404 = vmatprep.subr.mxu0 %v341
    %405 = vmatpush1.msra.mxu0 %v340
    %406 = vmatprep.subr.mxu0 %v343
    %407 = vmatpush1.msra.mxu0 %v342
    %408 = vmatprep.subr.mxu0 %v345
    %409 = vmatpush1.msra.mxu0 %v344
    %410 = vmatprep.subr.mxu0 %v347
    %411 = vmatpush1.msra.mxu0 %v346
    %412 = vmatprep.subr.mxu0 %v349
    %413 = vmatpush1.msra.mxu0 %v348
    %414 = vmatprep.subr.mxu0 %v351
    %415 = vmatpush1.msra.mxu0 %v350
    %416 = vmatprep.subr.mxu0 %v353
    %417 = vmatpush1.msra.mxu0 %v352
    %418 = vmatprep.subr.mxu0 %v355
    %419 = vmatpush1.msra.mxu0 %v354
    %420 = vmatprep.subr.mxu0 %v357
    %421 = vmatpush1.msra.mxu0 %v356
    %422 = vmatprep.subr.mxu0 %v359
    %423 = vmatpush1.msra.mxu0 %v358
    %424 = vmatprep.subr.mxu0 %v361
    %425 = vmatpush1.msra.mxu0 %v360
    %426 = vmatprep.subr.mxu0 %v363
    %427 = vmatpush1.msra.mxu0 %v362
    %428 = vmatprep.subr.mxu0 %v365
    %429 = vmatpush1.msra.mxu0 %v364
    %430 = vmatprep.subr.mxu0 %v367
    %431 = vmatpush1.msra.mxu0 %v366
    %432 = vmatprep.subr.mxu0 %v369
    %433 = vmatpush1.msra.mxu0 %v368
    %434 = vmatprep.subr.mxu0 %v371
    %435 = vmatpush1.msra.mxu0 %v370
    %436 = vmatprep.subr.mxu0 %v373
    %437 = vmatpush1.msra.mxu0 %v372
    %438 = vmatprep.subr.mxu0 %v375
    %439 = vmatpush1.msra.mxu0 %v374
    %440 = vmatprep.subr.mxu0 %v377
    %441 = vmatpush1.msra.mxu0 %v376
    %442 = vmatprep.subr.mxu0 %v379
    %443 = vmatpush1.msra.mxu0 %v378
    %444 = vmatprep.subr.mxu0 %v381
    %445 = vmatpush1.msra.mxu0 %v380
    %446 = vmatprep.subr.mxu0 %v383
    %447 = vmatpush1.msra.mxu0 %v382
    %448 = vmatprep.subr.mxu0 %v385
    %449 = vmatpush1.msra.mxu0 %v384
    %450 = vmatprep.subr.mxu0 %v387
    %451 = vmatpush1.msra.mxu0 %v386
    %452 = vmatprep.subr.mxu0 %v389
    %453 = vmatpush1.msra.mxu0 %v388
    %454 = vmatprep.subr.mxu0 %v391
    %455 = vmatpush1.msra.mxu0 %v390
    %456 = vmatprep.subr.mxu0 %v393
    %457 = vmatpush1.msra.mxu0 %v392
    %458 = vmatprep.subr.mxu0 %v395
    %459 = vmatpush1.msra.mxu0 %v394
    %460 = vmatprep.subr.mxu0 %v397
    %461 = vmatpush1.msra.mxu0 %v396
    %462 = vmatprep.subr.mxu0 %v399
    %463 = vmatpush1.msra.mxu0 %v398
    %464 = vmatprep.mubr.f32.mxu0 %v332
    %465 = vmatmul.mubr.f32.gmra.mrb[0].mxu0 %v331
    %v466 = vpop.f32.mrb[0].mxu0
    %v467 = vadd.f32 0.0, %v466
    %v468 = vpop.f32.mrb[0].mxu0
    %v469 = vadd.f32 0.0, %v468
    %470 = vmatprep.mubr.f32.mxu0 %v334
    %471 = vmatmul.mubr.f32.gmra.mrb[0].mxu0 %v333
    %v472 = vpop.f32.mrb[0].mxu0
    %v473 = vadd.f32 0.0, %v472
    %v474 = vpop.f32.mrb[0].mxu0
    %v475 = vadd.f32 0.0, %v474
    %476 = vdwg.mxu0
    %v477 = vadd.f32 %v467, %v473
    %v478 = vrot.slane %v477, 4
    %v479 = vadd.f32 %v477, %v478
    %v480 = vrot.slane %v479, 2
    %v481 = vadd.f32 %v479, %v480
    %v482 = vrot.slane %v481, 1
    %v483 = vadd.f32 %v481, %v482
    %v484 = vadd.f32 %v469, %v475
    %v485 = vrot.slane %v484, 4
    %v486 = vadd.f32 %v484, %v485
    %v487 = vrot.slane %v486, 2
    %v488 = vadd.f32 %v486, %v487
    %v489 = vrot.slane %v488, 1
    %v490 = vadd.f32 %v488, %v489
    %v491 = vmul.f32 %v467, %v467
    %v492 = vmul.f32 %v469, %v469
    %v493 = vmul.f32 %v473, %v473
    %v494 = vmul.f32 %v475, %v475
    %v495 = vadd.f32 %v491, %v493
    %v496 = vrot.slane %v495, 4
    %v497 = vadd.f32 %v495, %v496
    %v498 = vrot.slane %v497, 2
    %v499 = vadd.f32 %v497, %v498
    %v500 = vrot.slane %v499, 1
    %v501 = vadd.f32 %v499, %v500
    %v502 = vadd.f32 %v492, %v494
    %v503 = vrot.slane %v502, 4
    %v504 = vadd.f32 %v502, %v503
    %v505 = vrot.slane %v504, 2
    %v506 = vadd.f32 %v504, %v505
    %v507 = vrot.slane %v506, 1
    %v508 = vadd.f32 %v506, %v507
    %v509 = vmul.f32 %v483, 0.0625
    %v510 = vmul.f32 %v490, 0.0625
    %v511 = vmul.f32 %v501, 0.0625
    %v512 = vmul.f32 %v508, 0.0625
    %v513 = vmul.f32 %v509, %v509
    %v514 = vmul.f32 %v510, %v510
    %v515 = vsub.f32 %v511, %v513
    %v516 = vsub.f32 %v512, %v514
    %v517 = vmax.f32 %v515, 0.0
    %v518 = vmax.f32 %v516, 0.0
    %v519 = vadd.f32 %v517, 1e-05
    %v520 = vadd.f32 %v518, 1e-05
    %v521 = vrsqrt.pop %v519
    %v522 = vrsqrt.pop %v520
    %s523 = scalar_lea.vmem [#allocation6], 1
    %v524 = vld [vmem:[%s523] ss:$8 sm:$0x3]
    %v527 = vcombine.low %v521, %v522
    %v529 = vunpack.c.l.s4 1966171168
    %v530 = vunpack.c.0.s8 %v529
    %v531 = vlaneseq
    %v532 = vshrl.u32 %v531, 7
    %v533 = vsub.s32 %v530, %v532
    %v534 = vrot.slane %v527, %v533
    %v536 = vunpack.c.l.s4 1966171168
    %v537 = vunpack.c.0.s8 %v536
    %v538 = vlaneseq
    %v539 = vshrl.u32 %v538, 7
    %v540 = vsub.s32 %v537, %v539
    %v541 = vrot.slane %v534, %v540
    %v543 = vmul.f32 %v524, %v541
    %s544 = scalar_lea.vmem [#allocation7], 1
    %v545 = vld [vmem:[%s544] ss:$8 sm:$0x3]
    %v547 = vlaneseq
    %v548 = vshrl.u32 %v547, 7
    %v549 = vsub.s32 0, %v548
    %v550 = vrot.slane %v543, %v549
    %v551 = vlaneseq
    %v552 = vshrl.u32 %v551, 7
    %v553 = vsub.s32 1, %v552
    %v554 = vrot.slane %v543, %v553
    %v557 = vmul.f32 %v509, %v550
    %v558 = vmul.f32 %v510, %v554
    %v561 = vcombine.low %v557, %v558
    %v563 = vunpack.c.l.s4 1966171168
    %v564 = vunpack.c.0.s8 %v563
    %v565 = vlaneseq
    %v566 = vshrl.u32 %v565, 7
    %v567 = vsub.s32 %v564, %v566
    %v568 = vrot.slane %v561, %v567
    %v570 = vunpack.c.l.s4 1966171168
    %v571 = vunpack.c.0.s8 %v570
    %v572 = vlaneseq
    %v573 = vshrl.u32 %v572, 7
    %v574 = vsub.s32 %v571, %v573
    %v575 = vrot.slane %v568, %v574
    %v577 = vsub.f32 %v545, %v575
    %v578 = vmul.f32 %v467, %v550
    %v579 = vmul.f32 %v469, %v554
    %v580 = vmul.f32 %v473, %v550
    %v581 = vmul.f32 %v475, %v554
    %v583 = vlaneseq
    %v584 = vshrl.u32 %v583, 7
    %v585 = vsub.s32 0, %v584
    %v586 = vrot.slane %v577, %v585
    %v587 = vlaneseq
    %v588 = vshrl.u32 %v587, 7
    %v589 = vsub.s32 1, %v588
    %v590 = vrot.slane %v577, %v589
    %v593 = vadd.f32 %v578, %v586
    %v594 = vadd.f32 %v579, %v590
    %v595 = vadd.f32 %v580, %v586
    %v596 = vadd.f32 %v581, %v590
    %v597 = vmax.f32 %v593, 0.0
    %v598 = vmax.f32 %v594, 0.0
    %v599 = vmax.f32 %v595, 0.0
    %v600 = vmax.f32 %v596, 0.0
    %s601 = scalar_lea.vmem [#allocation4], 1024
    %v602 = vld [vmem:[%s601] sm:$0xff]
    %v603 = vld [vmem:[%s601 + $0x8] sm:$0xff]
    %v604 = vld [vmem:[%s601 + $0x10] sm:$0xff]
    %v605 = vld [vmem:[%s601 + $0x18] sm:$0xff]
    %v606 = vld [vmem:[%s601 + $0x20] sm:$0xff]
    %v607 = vld [vmem:[%s601 + $0x28] sm:$0xff]
    %v608 = vld [vmem:[%s601 + $0x30] sm:$0xff]
    %v609 = vld [vmem:[%s601 + $0x38] sm:$0xff]
    %v610 = vld [vmem:[%s601 + $0x40] sm:$0xff]
    %v611 = vld [vmem:[%s601 + $0x48] sm:$0xff]
    %v612 = vld [vmem:[%s601 + $0x50] sm:$0xff]
    %v613 = vld [vmem:[%s601 + $0x58] sm:$0xff]
    %v614 = vld [vmem:[%s601 + $0x60] sm:$0xff]
    %v615 = vld [vmem:[%s601 + $0x68] sm:$0xff]
    %v616 = vld [vmem:[%s601 + $0x70] sm:$0xff]
    %v617 = vld [vmem:[%s601 + $0x78] sm:$0xff]
    %v618 = vld [vmem:[%s601 + $0x80] sm:$0xff]
    %v619 = vld [vmem:[%s601 + $0x88] sm:$0xff]
    %v620 = vld [vmem:[%s601 + $0x90] sm:$0xff]
    %v621 = vld [vmem:[%s601 + $0x98] sm:$0xff]
    %v622 = vld [vmem:[%s601 + $0xa0] sm:$0xff]
    %v623 = vld [vmem:[%s601 + $0xa8] sm:$0xff]
    %v624 = vld [vmem:[%s601 + $0xb0] sm:$0xff]
    %v625 = vld [vmem:[%s601 + $0xb8] sm:$0xff]
    %v626 = vld [vmem:[%s601 + $0xc0] sm:$0xff]
    %v627 = vld [vmem:[%s601 + $0xc8] sm:$0xff]
    %v628 = vld [vmem:[%s601 + $0xd0] sm:$0xff]
    %v629 = vld [vmem:[%s601 + $0xd8] sm:$0xff]
    %v630 = vld [vmem:[%s601 + $0xe0] sm:$0xff]
    %v631 = vld [vmem:[%s601 + $0xe8] sm:$0xff]
    %v632 = vld [vmem:[%s601 + $0xf0] sm:$0xff]
    %v633 = vld [vmem:[%s601 + $0xf8] sm:$0xff]
    %v634 = vld [vmem:[%s601 + $0x100] sm:$0xff]
    %v635 = vld [vmem:[%s601 + $0x108] sm:$0xff]
    %v636 = vld [vmem:[%s601 + $0x110] sm:$0xff]
    %v637 = vld [vmem:[%s601 + $0x118] sm:$0xff]
    %v638 = vld [vmem:[%s601 + $0x120] sm:$0xff]
    %v639 = vld [vmem:[%s601 + $0x128] sm:$0xff]
    %v640 = vld [vmem:[%s601 + $0x130] sm:$0xff]
    %v641 = vld [vmem:[%s601 + $0x138] sm:$0xff]
    %v642 = vld [vmem:[%s601 + $0x140] sm:$0xff]
    %v643 = vld [vmem:[%s601 + $0x148] sm:$0xff]
    %v644 = vld [vmem:[%s601 + $0x150] sm:$0xff]
    %v645 = vld [vmem:[%s601 + $0x158] sm:$0xff]
    %v646 = vld [vmem:[%s601 + $0x160] sm:$0xff]
    %v647 = vld [vmem:[%s601 + $0x168] sm:$0xff]
    %v648 = vld [vmem:[%s601 + $0x170] sm:$0xff]
    %v649 = vld [vmem:[%s601 + $0x178] sm:$0xff]
    %v650 = vld [vmem:[%s601 + $0x180] sm:$0xff]
    %v651 = vld [vmem:[%s601 + $0x188] sm:$0xff]
    %v652 = vld [vmem:[%s601 + $0x190] sm:$0xff]
    %v653 = vld [vmem:[%s601 + $0x198] sm:$0xff]
    %v654 = vld [vmem:[%s601 + $0x1a0] sm:$0xff]
    %v655 = vld [vmem:[%s601 + $0x1a8] sm:$0xff]
    %v656 = vld [vmem:[%s601 + $0x1b0] sm:$0xff]
    %v657 = vld [vmem:[%s601 + $0x1b8] sm:$0xff]
    %v658 = vld [vmem:[%s601 + $0x1c0] sm:$0xff]
    %v659 = vld [vmem:[%s601 + $0x1c8] sm:$0xff]
    %v660 = vld [vmem:[%s601 + $0x1d0] sm:$0xff]
    %v661 = vld [vmem:[%s601 + $0x1d8] sm:$0xff]
    %v662 = vld [vmem:[%s601 + $0x1e0] sm:$0xff]
    %v663 = vld [vmem:[%s601 + $0x1e8] sm:$0xff]
    %v664 = vld [vmem:[%s601 + $0x1f0] sm:$0xff]
    %v665 = vld [vmem:[%s601 + $0x1f8] sm:$0xff]
    %666 = vmatprep.subr.mxu0 %v603
    %667 = vmatpush1.msra.mxu0 %v602
    %668 = vmatprep.subr.mxu0 %v605
    %669 = vmatpush1.msra.mxu0 %v604
    %670 = vmatprep.subr.mxu0 %v607
    %671 = vmatpush1.msra.mxu0 %v606
    %672 = vmatprep.subr.mxu0 %v609
    %673 = vmatpush1.msra.mxu0 %v608
    %674 = vmatprep.subr.mxu0 %v611
    %675 = vmatpush1.msra.mxu0 %v610
    %676 = vmatprep.subr.mxu0 %v613
    %677 = vmatpush1.msra.mxu0 %v612
    %678 = vmatprep.subr.mxu0 %v615
    %679 = vmatpush1.msra.mxu0 %v614
    %680 = vmatprep.subr.mxu0 %v617
    %681 = vmatpush1.msra.mxu0 %v616
    %682 = vmatprep.subr.mxu0 %v619
    %683 = vmatpush1.msra.mxu0 %v618
    %684 = vmatprep.subr.mxu0 %v621
    %685 = vmatpush1.msra.mxu0 %v620
    %686 = vmatprep.subr.mxu0 %v623
    %687 = vmatpush1.msra.mxu0 %v622
    %688 = vmatprep.subr.mxu0 %v625
    %689 = vmatpush1.msra.mxu0 %v624
    %690 = vmatprep.subr.mxu0 %v627
    %691 = vmatpush1.msra.mxu0 %v626
    %692 = vmatprep.subr.mxu0 %v629
    %693 = vmatpush1.msra.mxu0 %v628
    %694 = vmatprep.subr.mxu0 %v631
    %695 = vmatpush1.msra.mxu0 %v630
    %696 = vmatprep.subr.mxu0 %v633
    %697 = vmatpush1.msra.mxu0 %v632
    %698 = vmatprep.subr.mxu0 %v635
    %699 = vmatpush1.msra.mxu0 %v634
    %700 = vmatprep.subr.mxu0 %v637
    %701 = vmatpush1.msra.mxu0 %v636
    %702 = vmatprep.subr.mxu0 %v639
    %703 = vmatpush1.msra.mxu0 %v638
    %704 = vmatprep.subr.mxu0 %v641
    %705 = vmatpush1.msra.mxu0 %v640
    %706 = vmatprep.subr.mxu0 %v643
    %707 = vmatpush1.msra.mxu0 %v642
    %708 = vmatprep.subr.mxu0 %v645
    %709 = vmatpush1.msra.mxu0 %v644
    %710 = vmatprep.subr.mxu0 %v647
    %711 = vmatpush1.msra.mxu0 %v646
    %712 = vmatprep.subr.mxu0 %v649
    %713 = vmatpush1.msra.mxu0 %v648
    %714 = vmatprep.subr.mxu0 %v651
    %715 = vmatpush1.msra.mxu0 %v650
    %716 = vmatprep.subr.mxu0 %v653
    %717 = vmatpush1.msra.mxu0 %v652
    %718 = vmatprep.subr.mxu0 %v655
    %719 = vmatpush1.msra.mxu0 %v654
    %720 = vmatprep.subr.mxu0 %v657
    %721 = vmatpush1.msra.mxu0 %v656
    %722 = vmatprep.subr.mxu0 %v659
    %723 = vmatpush1.msra.mxu0 %v658
    %724 = vmatprep.subr.mxu0 %v661
    %725 = vmatpush1.msra.mxu0 %v660
    %726 = vmatprep.subr.mxu0 %v663
    %727 = vmatpush1.msra.mxu0 %v662
    %728 = vmatprep.subr.mxu0 %v665
    %729 = vmatpush1.msra.mxu0 %v664
    %730 = vmatprep.mubr.f32.mxu0 %v598
    %731 = vmatmul.mubr.f32.gmra.mrb[0].mxu0 %v597
    %v732 = vpop.f32.mrb[0].mxu0
    %v733 = vadd.f32 0.0, %v732
    %v734 = vpop.f32.mrb[0].mxu0
    %v735 = vadd.f32 0.0, %v734
    %736 = vmatprep.mubr.f32.mxu0 %v600
    %737 = vmatmul.mubr.f32.gmra.mrb[0].mxu0 %v599
    %v738 = vpop.f32.mrb[0].mxu0
    %v739 = vadd.f32 0.0, %v738
    %v740 = vpop.f32.mrb[0].mxu0
    %v741 = vadd.f32 0.0, %v740
    %742 = vdwg.mxu0
    %v743 = vadd.f32 %v733, %v739
    %v744 = vrot.slane %v743, 4
    %v745 = vadd.f32 %v743, %v744
    %v746 = vrot.slane %v745, 2
    %v747 = vadd.f32 %v745, %v746
    %v748 = vrot.slane %v747, 1
    %v749 = vadd.f32 %v747, %v748
    %v750 = vadd.f32 %v735, %v741
    %v751 = vrot.slane %v750, 4
    %v752 = vadd.f32 %v750, %v751
    %v753 = vrot.slane %v752, 2
    %v754 = vadd.f32 %v752, %v753
    %v755 = vrot.slane %v754, 1
    %v756 = vadd.f32 %v754, %v755
    %v757 = vmul.f32 %v733, %v733
    %v758 = vmul.f32 %v735, %v735
    %v759 = vmul.f32 %v739, %v739
    %v760 = vmul.f32 %v741, %v741
    %v761 = vadd.f32 %v757, %v759
    %v762 = vrot.slane %v761, 4
    %v763 = vadd.f32 %v761, %v762
    %v764 = vrot.slane %v763, 2
    %v765 = vadd.f32 %v763, %v764
    %v766 = vrot.slane %v765, 1
    %v767 = vadd.f32 %v765, %v766
    %v768 = vadd.f32 %v758, %v760
    %v769 = vrot.slane %v768, 4
    %v770 = vadd.f32 %v768, %v769
    %v771 = vrot.slane %v770, 2
    %v772 = vadd.f32 %v770, %v771
    %v773 = vrot.slane %v772, 1
    %v774 = vadd.f32 %v772, %v773
    %v775 = vmul.f32 %v749, 0.0625
    %v776 = vmul.f32 %v756, 0.0625
    %v777 = vmul.f32 %v767, 0.0625
    %v778 = vmul.f32 %v774, 0.0625
    %v779 = vmul.f32 %v775, %v775
    %v780 = vmul.f32 %v776, %v776
    %v781 = vsub.f32 %v777, %v779
    %v782 = vsub.f32 %v778, %v780
    %v783 = vmax.f32 %v781, 0.0
    %v784 = vmax.f32 %v782, 0.0
    %v785 = vadd.f32 %v783, 1e-05
    %v786 = vadd.f32 %v784, 1e-05
    %v787 = vrsqrt.pop %v785
    %v788 = vrsqrt.pop %v786
    %s789 = scalar_lea.vmem [#allocation6], 2
    %v790 = vld [vmem:[%s789] ss:$8 sm:$0x3]
    %v793 = vcombine.low %v787, %v788
    %v795 = vunpack.c.l.s4 1966171168
    %v796 = vunpack.c.0.s8 %v795
    %v797 = vlaneseq
    %v798 = vshrl.u32 %v797, 7
    %v799 = vsub.s32 %v796, %v798
    %v800 = vrot.slane %v793, %v799
    %v802 = vunpack.c.l.s4 1966171168
    %v803 = vunpack.c.0.s8 %v802
    %v804 = vlaneseq
    %v805 = vshrl.u32 %v804, 7
    %v806 = vsub.s32 %v803, %v805
    %v807 = vrot.slane %v800, %v806
    %v809 = vmul.f32 %v790, %v807
    %s810 = scalar_lea.vmem [#allocation7], 2
    %v811 = vld [vmem:[%s810] ss:$8 sm:$0x3]
    %v813 = vlaneseq
    %v814 = vshrl.u32 %v813, 7
    %v815 = vsub.s32 0, %v814
    %v816 = vrot.slane %v809, %v815
    %v817 = vlaneseq
    %v818 = vshrl.u32 %v817, 7
    %v819 = vsub.s32 1, %v818
    %v820 = vrot.slane %v809, %v819
    %v823 = vmul.f32 %v775, %v816
    %v824 = vmul.f32 %v776, %v820
    %v827 = vcombine.low %v823, %v824
    %v829 = vunpack.c.l.s4 1966171168
    %v830 = vunpack.c.0.s8 %v829
    %v831 = vlaneseq
    %v832 = vshrl.u32 %v831, 7
    %v833 = vsub.s32 %v830, %v832
    %v834 = vrot.slane %v827, %v833
    %v836 = vunpack.c.l.s4 1966171168
    %v837 = vunpack.c.0.s8 %v836
    %v838 = vlaneseq
    %v839 = vshrl.u32 %v838, 7
    %v840 = vsub.s32 %v837, %v839
    %v841 = vrot.slane %v834, %v840
    %v843 = vsub.f32 %v811, %v841
    %v844 = vmul.f32 %v733, %v816
    %v845 = vmul.f32 %v735, %v820
    %v846 = vmul.f32 %v739, %v816
    %v847 = vmul.f32 %v741, %v820
    %v849 = vlaneseq
    %v850 = vshrl.u32 %v849, 7
    %v851 = vsub.s32 0, %v850
    %v852 = vrot.slane %v843, %v851
    %v853 = vlaneseq
    %v854 = vshrl.u32 %v853, 7
    %v855 = vsub.s32 1, %v854
    %v856 = vrot.slane %v843, %v855
    %v859 = vadd.f32 %v844, %v852
    %v860 = vadd.f32 %v845, %v856
    %v861 = vadd.f32 %v846, %v852
    %v862 = vadd.f32 %v847, %v856
    %v863 = vmax.f32 %v859, 0.0
    %v864 = vmax.f32 %v860, 0.0
    %v865 = vmax.f32 %v861, 0.0
    %v866 = vmax.f32 %v862, 0.0
    %s867 = scalar_lea.vmem [#allocation4], 1536
    %v868 = vld [vmem:[%s867] sm:$0xff]
    %v869 = vld [vmem:[%s867 + $0x8] sm:$0xff]
    %v870 = vld [vmem:[%s867 + $0x10] sm:$0xff]
    %v871 = vld [vmem:[%s867 + $0x18] sm:$0xff]
    %v872 = vld [vmem:[%s867 + $0x20] sm:$0xff]
    %v873 = vld [vmem:[%s867 + $0x28] sm:$0xff]
    %v874 = vld [vmem:[%s867 + $0x30] sm:$0xff]
    %v875 = vld [vmem:[%s867 + $0x38] sm:$0xff]
    %v876 = vld [vmem:[%s867 + $0x40] sm:$0xff]
    %v877 = vld [vmem:[%s867 + $0x48] sm:$0xff]
    %v878 = vld [vmem:[%s867 + $0x50] sm:$0xff]
    %v879 = vld [vmem:[%s867 + $0x58] sm:$0xff]
    %v880 = vld [vmem:[%s867 + $0x60] sm:$0xff]
    %v881 = vld [vmem:[%s867 + $0x68] sm:$0xff]
    %v882 = vld [vmem:[%s867 + $0x70] sm:$0xff]
    %v883 = vld [vmem:[%s867 + $0x78] sm:$0xff]
    %v884 = vld [vmem:[%s867 + $0x80] sm:$0xff]
    %v885 = vld [vmem:[%s867 + $0x88] sm:$0xff]
    %v886 = vld [vmem:[%s867 + $0x90] sm:$0xff]
    %v887 = vld [vmem:[%s867 + $0x98] sm:$0xff]
    %v888 = vld [vmem:[%s867 + $0xa0] sm:$0xff]
    %v889 = vld [vmem:[%s867 + $0xa8] sm:$0xff]
    %v890 = vld [vmem:[%s867 + $0xb0] sm:$0xff]
    %v891 = vld [vmem:[%s867 + $0xb8] sm:$0xff]
    %v892 = vld [vmem:[%s867 + $0xc0] sm:$0xff]
    %v893 = vld [vmem:[%s867 + $0xc8] sm:$0xff]
    %v894 = vld [vmem:[%s867 + $0xd0] sm:$0xff]
    %v895 = vld [vmem:[%s867 + $0xd8] sm:$0xff]
    %v896 = vld [vmem:[%s867 + $0xe0] sm:$0xff]
    %v897 = vld [vmem:[%s867 + $0xe8] sm:$0xff]
    %v898 = vld [vmem:[%s867 + $0xf0] sm:$0xff]
    %v899 = vld [vmem:[%s867 + $0xf8] sm:$0xff]
    %v900 = vld [vmem:[%s867 + $0x100] sm:$0xff]
    %v901 = vld [vmem:[%s867 + $0x108] sm:$0xff]
    %v902 = vld [vmem:[%s867 + $0x110] sm:$0xff]
    %v903 = vld [vmem:[%s867 + $0x118] sm:$0xff]
    %v904 = vld [vmem:[%s867 + $0x120] sm:$0xff]
    %v905 = vld [vmem:[%s867 + $0x128] sm:$0xff]
    %v906 = vld [vmem:[%s867 + $0x130] sm:$0xff]
    %v907 = vld [vmem:[%s867 + $0x138] sm:$0xff]
    %v908 = vld [vmem:[%s867 + $0x140] sm:$0xff]
    %v909 = vld [vmem:[%s867 + $0x148] sm:$0xff]
    %v910 = vld [vmem:[%s867 + $0x150] sm:$0xff]
    %v911 = vld [vmem:[%s867 + $0x158] sm:$0xff]
    %v912 = vld [vmem:[%s867 + $0x160] sm:$0xff]
    %v913 = vld [vmem:[%s867 + $0x168] sm:$0xff]
    %v914 = vld [vmem:[%s867 + $0x170] sm:$0xff]
    %v915 = vld [vmem:[%s867 + $0x178] sm:$0xff]
    %v916 = vld [vmem:[%s867 + $0x180] sm:$0xff]
    %v917 = vld [vmem:[%s867 + $0x188] sm:$0xff]
    %v918 = vld [vmem:[%s867 + $0x190] sm:$0xff]
    %v919 = vld [vmem:[%s867 + $0x198] sm:$0xff]
    %v920 = vld [vmem:[%s867 + $0x1a0] sm:$0xff]
    %v921 = vld [vmem:[%s867 + $0x1a8] sm:$0xff]
    %v922 = vld [vmem:[%s867 + $0x1b0] sm:$0xff]
    %v923 = vld [vmem:[%s867 + $0x1b8] sm:$0xff]
    %v924 = vld [vmem:[%s867 + $0x1c0] sm:$0xff]
    %v925 = vld [vmem:[%s867 + $0x1c8] sm:$0xff]
    %v926 = vld [vmem:[%s867 + $0x1d0] sm:$0xff]
    %v927 = vld [vmem:[%s867 + $0x1d8] sm:$0xff]
    %v928 = vld [vmem:[%s867 + $0x1e0] sm:$0xff]
    %v929 = vld [vmem:[%s867 + $0x1e8] sm:$0xff]
    %v930 = vld [vmem:[%s867 + $0x1f0] sm:$0xff]
    %v931 = vld [vmem:[%s867 + $0x1f8] sm:$0xff]
    %932 = vmatprep.subr.mxu0 %v869
    %933 = vmatpush1.msra.mxu0 %v868
    %934 = vmatprep.subr.mxu0 %v871
    %935 = vmatpush1.msra.mxu0 %v870
    %936 = vmatprep.subr.mxu0 %v873
    %937 = vmatpush1.msra.mxu0 %v872
    %938 = vmatprep.subr.mxu0 %v875
    %939 = vmatpush1.msra.mxu0 %v874
    %940 = vmatprep.subr.mxu0 %v877
    %941 = vmatpush1.msra.mxu0 %v876
    %942 = vmatprep.subr.mxu0 %v879
    %943 = vmatpush1.msra.mxu0 %v878
    %944 = vmatprep.subr.mxu0 %v881
    %945 = vmatpush1.msra.mxu0 %v880
    %946 = vmatprep.subr.mxu0 %v883
    %947 = vmatpush1.msra.mxu0 %v882
    %948 = vmatprep.subr.mxu0 %v885
    %949 = vmatpush1.msra.mxu0 %v884
    %950 = vmatprep.subr.mxu0 %v887
    %951 = vmatpush1.msra.mxu0 %v886
    %952 = vmatprep.subr.mxu0 %v889
    %953 = vmatpush1.msra.mxu0 %v888
    %954 = vmatprep.subr.mxu0 %v891
    %955 = vmatpush1.msra.mxu0 %v890
    %956 = vmatprep.subr.mxu0 %v893
    %957 = vmatpush1.msra.mxu0 %v892
    %958 = vmatprep.subr.mxu0 %v895
    %959 = vmatpush1.msra.mxu0 %v894
    %960 = vmatprep.subr.mxu0 %v897
    %961 = vmatpush1.msra.mxu0 %v896
    %962 = vmatprep.subr.mxu0 %v899
    %963 = vmatpush1.msra.mxu0 %v898
    %964 = vmatprep.subr.mxu0 %v901
    %965 = vmatpush1.msra.mxu0 %v900
    %966 = vmatprep.subr.mxu0 %v903
    %967 = vmatpush1.msra.mxu0 %v902
    %968 = vmatprep.subr.mxu0 %v905
    %969 = vmatpush1.msra.mxu0 %v904
    %970 = vmatprep.subr.mxu0 %v907
    %971 = vmatpush1.msra.mxu0 %v906
    %972 = vmatprep.subr.mxu0 %v909
    %973 = vmatpush1.msra.mxu0 %v908
    %974 = vmatprep.subr.mxu0 %v911
    %975 = vmatpush1.msra.mxu0 %v910
    %976 = vmatprep.subr.mxu0 %v913
    %977 = vmatpush1.msra.mxu0 %v912
    %978 = vmatprep.subr.mxu0 %v915
    %979 = vmatpush1.msra.mxu0 %v914
    %980 = vmatprep.subr.mxu0 %v917
    %981 = vmatpush1.msra.mxu0 %v916
    %982 = vmatprep.subr.mxu0 %v919
    %983 = vmatpush1.msra.mxu0 %v918
    %984 = vmatprep.subr.mxu0 %v921
    %985 = vmatpush1.msra.mxu0 %v920
    %986 = vmatprep.subr.mxu0 %v923
    %987 = vmatpush1.msra.mxu0 %v922
    %988 = vmatprep.subr.mxu0 %v925
    %989 = vmatpush1.msra.mxu0 %v924
    %990 = vmatprep.subr.mxu0 %v927
    %991 = vmatpush1.msra.mxu0 %v926
    %992 = vmatprep.subr.mxu0 %v929
    %993 = vmatpush1.msra.mxu0 %v928
    %994 = vmatprep.subr.mxu0 %v931
    %995 = vmatpush1.msra.mxu0 %v930
    %996 = vmatprep.mubr.f32.mxu0 %v864
    %997 = vmatmul.mubr.f32.gmra.mrb[0].mxu0 %v863
    %v998 = vpop.f32.mrb[0].mxu0
    %v999 = vadd.f32 0.0, %v998
    %v1000 = vpop.f32.mrb[0].mxu0
    %v1001 = vadd.f32 0.0, %v1000
    %1002 = vmatprep.mubr.f32.mxu0 %v866
    %1003 = vmatmul.mubr.f32.gmra.mrb[0].mxu0 %v865
    %v1004 = vpop.f32.mrb[0].mxu0
    %v1005 = vadd.f32 0.0, %v1004
    %v1006 = vpop.f32.mrb[0].mxu0
    %v1007 = vadd.f32 0.0, %v1006
    %1008 = vdwg.mxu0
    %v1009 = vadd.f32 %v999, %v1005
    %v1010 = vrot.slane %v1009, 4
    %v1011 = vadd.f32 %v1009, %v1010
    %v1012 = vrot.slane %v1011, 2
    %v1013 = vadd.f32 %v1011, %v1012
    %v1014 = vrot.slane %v1013, 1
    %v1015 = vadd.f32 %v1013, %v1014
    %v1016 = vadd.f32 %v1001, %v1007
    %v1017 = vrot.slane %v1016, 4
    %v1018 = vadd.f32 %v1016, %v1017
    %v1019 = vrot.slane %v1018, 2
    %v1020 = vadd.f32 %v1018, %v1019
    %v1021 = vrot.slane %v1020, 1
    %v1022 = vadd.f32 %v1020, %v1021
    %v1023 = vmul.f32 %v999, %v999
    %v1024 = vmul.f32 %v1001, %v1001
    %v1025 = vmul.f32 %v1005, %v1005
    %v1026 = vmul.f32 %v1007, %v1007
    %v1027 = vadd.f32 %v1023, %v1025
    %v1028 = vrot.slane %v1027, 4
    %v1029 = vadd.f32 %v1027, %v1028
    %v1030 = vrot.slane %v1029, 2
    %v1031 = vadd.f32 %v1029, %v1030
    %v1032 = vrot.slane %v1031, 1
    %v1033 = vadd.f32 %v1031, %v1032
    %v1034 = vadd.f32 %v1024, %v1026
    %v1035 = vrot.slane %v1034, 4
    %v1036 = vadd.f32 %v1034, %v1035
    %v1037 = vrot.slane %v1036, 2
    %v1038 = vadd.f32 %v1036, %v1037
    %v1039 = vrot.slane %v1038, 1
    %v1040 = vadd.f32 %v1038, %v1039
    %v1041 = vmul.f32 %v1015, 0.0625
    %v1042 = vmul.f32 %v1022, 0.0625
    %v1043 = vmul.f32 %v1033, 0.0625
    %v1044 = vmul.f32 %v1040, 0.0625
    %v1045 = vmul.f32 %v1041, %v1041
    %v1046 = vmul.f32 %v1042, %v1042
    %v1047 = vsub.f32 %v1043, %v1045
    %v1048 = vsub.f32 %v1044, %v1046
    %v1049 = vmax.f32 %v1047, 0.0
    %v1050 = vmax.f32 %v1048, 0.0
    %v1051 = vadd.f32 %v1049, 1e-05
    %v1052 = vadd.f32 %v1050, 1e-05
    %v1053 = vrsqrt.pop %v1051
    %v1054 = vrsqrt.pop %v1052
    %s1055 = scalar_lea.vmem [#allocation6], 3
    %v1056 = vld [vmem:[%s1055] ss:$8 sm:$0x3]
    %v1059 = vcombine.low %v1053, %v1054
    %v1061 = vunpack.c.l.s4 1966171168
    %v1062 = vunpack.c.0.s8 %v1061
    %v1063 = vlaneseq
    %v1064 = vshrl.u32 %v1063, 7
    %v1065 = vsub.s32 %v1062, %v1064
    %v1066 = vrot.slane %v1059, %v1065
    %v1068 = vunpack.c.l.s4 1966171168
    %v1069 = vunpack.c.0.s8 %v1068
    %v1070 = vlaneseq
    %v1071 = vshrl.u32 %v1070, 7
    %v1072 = vsub.s32 %v1069, %v1071
    %v1073 = vrot.slane %v1066, %v1072
    %v1075 = vmul.f32 %v1056, %v1073
    %s1076 = scalar_lea.vmem [#allocation7], 3
    %v1077 = vld [vmem:[%s1076] ss:$8 sm:$0x3]
    %v1079 = vlaneseq
    %v1080 = vshrl.u32 %v1079, 7
    %v1081 = vsub.s32 0, %v1080
    %v1082 = vrot.slane %v1075, %v1081
    %v1083 = vlaneseq
    %v1084 = vshrl.u32 %v1083, 7
    %v1085 = vsub.s32 1, %v1084
    %v1086 = vrot.slane %v1075, %v1085
    %v1089 = vmul.f32 %v1041, %v1082
    %v1090 = vmul.f32 %v1042, %v1086
    %v1093 = vcombine.low %v1089, %v1090
    %v1095 = vunpack.c.l.s4 1966171168
    %v1096 = vunpack.c.0.s8 %v1095
    %v1097 = vlaneseq
    %v1098 = vshrl.u32 %v1097, 7
    %v1099 = vsub.s32 %v1096, %v1098
    %v1100 = vrot.slane %v1093, %v1099
    %v1102 = vunpack.c.l.s4 1966171168
    %v1103 = vunpack.c.0.s8 %v1102
    %v1104 = vlaneseq
    %v1105 = vshrl.u32 %v1104, 7
    %v1106 = vsub.s32 %v1103, %v1105
    %v1107 = vrot.slane %v1100, %v1106
    %v1109 = vsub.f32 %v1077, %v1107
    %v1110 = vmul.f32 %v999, %v1082
    %v1111 = vmul.f32 %v1001, %v1086
    %v1112 = vmul.f32 %v1005, %v1082
    %v1113 = vmul.f32 %v1007, %v1086
    %v1115 = vlaneseq
    %v1116 = vshrl.u32 %v1115, 7
    %v1117 = vsub.s32 0, %v1116
    %v1118 = vrot.slane %v1109, %v1117
    %v1119 = vlaneseq
    %v1120 = vshrl.u32 %v1119, 7
    %v1121 = vsub.s32 1, %v1120
    %v1122 = vrot.slane %v1109, %v1121
    %v1125 = vadd.f32 %v1110, %v1118
    %v1126 = vadd.f32 %v1111, %v1122
    %v1127 = vadd.f32 %v1112, %v1118
    %v1128 = vadd.f32 %v1113, %v1122
    %v1129 = vmax.f32 %v1125, 0.0
    %v1130 = vmax.f32 %v1126, 0.0
    %v1131 = vmax.f32 %v1127, 0.0
    %v1132 = vmax.f32 %v1128, 0.0
    %s1133 = scalar_lea.vmem [#allocation4], 2048
    %v1134 = vld [vmem:[%s1133] sm:$0xff]
    %v1135 = vld [vmem:[%s1133 + $0x8] sm:$0xff]
    %v1136 = vld [vmem:[%s1133 + $0x10] sm:$0xff]
    %v1137 = vld [vmem:[%s1133 + $0x18] sm:$0xff]
    %v1138 = vld [vmem:[%s1133 + $0x20] sm:$0xff]
    %v1139 = vld [vmem:[%s1133 + $0x28] sm:$0xff]
    %v1140 = vld [vmem:[%s1133 + $0x30] sm:$0xff]
    %v1141 = vld [vmem:[%s1133 + $0x38] sm:$0xff]
    %v1142 = vld [vmem:[%s1133 + $0x40] sm:$0xff]
    %v1143 = vld [vmem:[%s1133 + $0x48] sm:$0xff]
    %v1144 = vld [vmem:[%s1133 + $0x50] sm:$0xff]
    %v1145 = vld [vmem:[%s1133 + $0x58] sm:$0xff]
    %v1146 = vld [vmem:[%s1133 + $0x60] sm:$0xff]
    %v1147 = vld [vmem:[%s1133 + $0x68] sm:$0xff]
    %v1148 = vld [vmem:[%s1133 + $0x70] sm:$0xff]
    %v1149 = vld [vmem:[%s1133 + $0x78] sm:$0xff]
    %v1150 = vld [vmem:[%s1133 + $0x80] sm:$0xff]
    %v1151 = vld [vmem:[%s1133 + $0x88] sm:$0xff]
    %v1152 = vld [vmem:[%s1133 + $0x90] sm:$0xff]
    %v1153 = vld [vmem:[%s1133 + $0x98] sm:$0xff]
    %v1154 = vld [vmem:[%s1133 + $0xa0] sm:$0xff]
    %v1155 = vld [vmem:[%s1133 + $0xa8] sm:$0xff]
    %v1156 = vld [vmem:[%s1133 + $0xb0] sm:$0xff]
    %v1157 = vld [vmem:[%s1133 + $0xb8] sm:$0xff]
    %v1158 = vld [vmem:[%s1133 + $0xc0] sm:$0xff]
    %v1159 = vld [vmem:[%s1133 + $0xc8] sm:$0xff]
    %v1160 = vld [vmem:[%s1133 + $0xd0] sm:$0xff]
    %v1161 = vld [vmem:[%s1133 + $0xd8] sm:$0xff]
    %v1162 = vld [vmem:[%s1133 + $0xe0] sm:$0xff]
    %v1163 = vld [vmem:[%s1133 + $0xe8] sm:$0xff]
    %v1164 = vld [vmem:[%s1133 + $0xf0] sm:$0xff]
    %v1165 = vld [vmem:[%s1133 + $0xf8] sm:$0xff]
    %v1166 = vld [vmem:[%s1133 + $0x100] sm:$0xff]
    %v1167 = vld [vmem:[%s1133 + $0x108] sm:$0xff]
    %v1168 = vld [vmem:[%s1133 + $0x110] sm:$0xff]
    %v1169 = vld [vmem:[%s1133 + $0x118] sm:$0xff]
    %v1170 = vld [vmem:[%s1133 + $0x120] sm:$0xff]
    %v1171 = vld [vmem:[%s1133 + $0x128] sm:$0xff]
    %v1172 = vld [vmem:[%s1133 + $0x130] sm:$0xff]
    %v1173 = vld [vmem:[%s1133 + $0x138] sm:$0xff]
    %v1174 = vld [vmem:[%s1133 + $0x140] sm:$0xff]
    %v1175 = vld [vmem:[%s1133 + $0x148] sm:$0xff]
    %v1176 = vld [vmem:[%s1133 + $0x150] sm:$0xff]
    %v1177 = vld [vmem:[%s1133 + $0x158] sm:$0xff]
    %v1178 = vld [vmem:[%s1133 + $0x160] sm:$0xff]
    %v1179 = vld [vmem:[%s1133 + $0x168] sm:$0xff]
    %v1180 = vld [vmem:[%s1133 + $0x170] sm:$0xff]
    %v1181 = vld [vmem:[%s1133 + $0x178] sm:$0xff]
    %v1182 = vld [vmem:[%s1133 + $0x180] sm:$0xff]
    %v1183 = vld [vmem:[%s1133 + $0x188] sm:$0xff]
    %v1184 = vld [vmem:[%s1133 + $0x190] sm:$0xff]
    %v1185 = vld [vmem:[%s1133 + $0x198] sm:$0xff]
    %v1186 = vld [vmem:[%s1133 + $0x1a0] sm:$0xff]
    %v1187 = vld [vmem:[%s1133 + $0x1a8] sm:$0xff]
    %v1188 = vld [vmem:[%s1133 + $0x1b0] sm:$0xff]
    %v1189 = vld [vmem:[%s1133 + $0x1b8] sm:$0xff]
    %v1190 = vld [vmem:[%s1133 + $0x1c0] sm:$0xff]
    %v1191 = vld [vmem:[%s1133 + $0x1c8] sm:$0xff]
    %v1192 = vld [vmem:[%s1133 + $0x1d0] sm:$0xff]
    %v1193 = vld [vmem:[%s1133 + $0x1d8] sm:$0xff]
    %v1194 = vld [vmem:[%s1133 + $0x1e0] sm:$0xff]
    %v1195 = vld [vmem:[%s1133 + $0x1e8] sm:$0xff]
    %v1196 = vld [vmem:[%s1133 + $0x1f0] sm:$0xff]
    %v1197 = vld [vmem:[%s1133 + $0x1f8] sm:$0xff]
    %1198 = vmatprep.subr.mxu0 %v1135
    %1199 = vmatpush1.msra.mxu0 %v1134
    %1200 = vmatprep.subr.mxu0 %v1137
    %1201 = vmatpush1.msra.mxu0 %v1136
    %1202 = vmatprep.subr.mxu0 %v1139
    %1203 = vmatpush1.msra.mxu0 %v1138
    %1204 = vmatprep.subr.mxu0 %v1141
    %1205 = vmatpush1.msra.mxu0 %v1140
    %1206 = vmatprep.subr.mxu0 %v1143
    %1207 = vmatpush1.msra.mxu0 %v1142
    %1208 = vmatprep.subr.mxu0 %v1145
    %1209 = vmatpush1.msra.mxu0 %v1144
    %1210 = vmatprep.subr.mxu0 %v1147
    %1211 = vmatpush1.msra.mxu0 %v1146
    %1212 = vmatprep.subr.mxu0 %v1149
    %1213 = vmatpush1.msra.mxu0 %v1148
    %1214 = vmatprep.subr.mxu0 %v1151
    %1215 = vmatpush1.msra.mxu0 %v1150
    %1216 = vmatprep.subr.mxu0 %v1153
    %1217 = vmatpush1.msra.mxu0 %v1152
    %1218 = vmatprep.subr.mxu0 %v1155
    %1219 = vmatpush1.msra.mxu0 %v1154
    %1220 = vmatprep.subr.mxu0 %v1157
    %1221 = vmatpush1.msra.mxu0 %v1156
    %1222 = vmatprep.subr.mxu0 %v1159
    %1223 = vmatpush1.msra.mxu0 %v1158
    %1224 = vmatprep.subr.mxu0 %v1161
    %1225 = vmatpush1.msra.mxu0 %v1160
    %1226 = vmatprep.subr.mxu0 %v1163
    %1227 = vmatpush1.msra.mxu0 %v1162
    %1228 = vmatprep.subr.mxu0 %v1165
    %1229 = vmatpush1.msra.mxu0 %v1164
    %1230 = vmatprep.subr.mxu0 %v1167
    %1231 = vmatpush1.msra.mxu0 %v1166
    %1232 = vmatprep.subr.mxu0 %v1169
    %1233 = vmatpush1.msra.mxu0 %v1168
    %1234 = vmatprep.subr.mxu0 %v1171
    %1235 = vmatpush1.msra.mxu0 %v1170
    %1236 = vmatprep.subr.mxu0 %v1173
    %1237 = vmatpush1.msra.mxu0 %v1172
    %1238 = vmatprep.subr.mxu0 %v1175
    %1239 = vmatpush1.msra.mxu0 %v1174
    %1240 = vmatprep.subr.mxu0 %v1177
    %1241 = vmatpush1.msra.mxu0 %v1176
    %1242 = vmatprep.subr.mxu0 %v1179
    %1243 = vmatpush1.msra.mxu0 %v1178
    %1244 = vmatprep.subr.mxu0 %v1181
    %1245 = vmatpush1.msra.mxu0 %v1180
    %1246 = vmatprep.subr.mxu0 %v1183
    %1247 = vmatpush1.msra.mxu0 %v1182
    %1248 = vmatprep.subr.mxu0 %v1185
    %1249 = vmatpush1.msra.mxu0 %v1184
    %1250 = vmatprep.subr.mxu0 %v1187
    %1251 = vmatpush1.msra.mxu0 %v1186
    %1252 = vmatprep.subr.mxu0 %v1189
    %1253 = vmatpush1.msra.mxu0 %v1188
    %1254 = vmatprep.subr.mxu0 %v1191
    %1255 = vmatpush1.msra.mxu0 %v1190
    %1256 = vmatprep.subr.mxu0 %v1193
    %1257 = vmatpush1.msra.mxu0 %v1192
    %1258 = vmatprep.subr.mxu0 %v1195
    %1259 = vmatpush1.msra.mxu0 %v1194
    %1260 = vmatprep.subr.mxu0 %v1197
    %1261 = vmatpush1.msra.mxu0 %v1196
    %1262 = vmatprep.mubr.f32.mxu0 %v1130
    %1263 = vmatmul.mubr.f32.gmra.mrb[0].mxu0 %v1129
    %v1264 = vpop.f32.mrb[0].mxu0
    %v1265 = vadd.f32 0.0, %v1264
    %v1266 = vpop.f32.mrb[0].mxu0
    %v1267 = vadd.f32 0.0, %v1266
    %1268 = vmatprep.mubr.f32.mxu0 %v1132
    %1269 = vmatmul.mubr.f32.gmra.mrb[0].mxu0 %v1131
    %v1270 = vpop.f32.mrb[0].mxu0
    %v1271 = vadd.f32 0.0, %v1270
    %v1272 = vpop.f32.mrb[0].mxu0
    %v1273 = vadd.f32 0.0, %v1272
    %1274 = vdwg.mxu0
    %v1275 = vadd.f32 %v1265, %v1271
    %v1276 = vrot.slane %v1275, 4
    %v1277 = vadd.f32 %v1275, %v1276
    %v1278 = vrot.slane %v1277, 2
    %v1279 = vadd.f32 %v1277, %v1278
    %v1280 = vrot.slane %v1279, 1
    %v1281 = vadd.f32 %v1279, %v1280
    %v1282 = vadd.f32 %v1267, %v1273
    %v1283 = vrot.slane %v1282, 4
    %v1284 = vadd.f32 %v1282, %v1283
    %v1285 = vrot.slane %v1284, 2
    %v1286 = vadd.f32 %v1284, %v1285
    %v1287 = vrot.slane %v1286, 1
    %v1288 = vadd.f32 %v1286, %v1287
    %v1289 = vmul.f32 %v1265, %v1265
    %v1290 = vmul.f32 %v1267, %v1267
    %v1291 = vmul.f32 %v1271, %v1271
    %v1292 = vmul.f32 %v1273, %v1273
    %v1293 = vadd.f32 %v1289, %v1291
    %v1294 = vrot.slane %v1293, 4
    %v1295 = vadd.f32 %v1293, %v1294
    %v1296 = vrot.slane %v1295, 2
    %v1297 = vadd.f32 %v1295, %v1296
    %v1298 = vrot.slane %v1297, 1
    %v1299 = vadd.f32 %v1297, %v1298
    %v1300 = vadd.f32 %v1290, %v1292
    %v1301 = vrot.slane %v1300, 4
    %v1302 = vadd.f32 %v1300, %v1301
    %v1303 = vrot.slane %v1302, 2
    %v1304 = vadd.f32 %v1302, %v1303
    %v1305 = vrot.slane %v1304, 1
    %v1306 = vadd.f32 %v1304, %v1305
    %v1307 = vmul.f32 %v1281, 0.0625
    %v1308 = vmul.f32 %v1288, 0.0625
    %v1309 = vmul.f32 %v1299, 0.0625
    %v1310 = vmul.f32 %v1306, 0.0625
    %v1311 = vmul.f32 %v1307, %v1307
    %v1312 = vmul.f32 %v1308, %v1308
    %v1313 = vsub.f32 %v1309, %v1311
    %v1314 = vsub.f32 %v1310, %v1312
    %v1315 = vmax.f32 %v1313, 0.0
    %v1316 = vmax.f32 %v1314, 0.0
    %v1317 = vadd.f32 %v1315, 1e-05
    %v1318 = vadd.f32 %v1316, 1e-05
    %v1319 = vrsqrt.pop %v1317
    %v1320 = vrsqrt.pop %v1318
    %s1321 = scalar_lea.vmem [#allocation6], 4
    %v1322 = vld [vmem:[%s1321] ss:$8 sm:$0x3]
    %v1325 = vcombine.low %v1319, %v1320
    %v1327 = vunpack.c.l.s4 1966171168
    %v1328 = vunpack.c.0.s8 %v1327
    %v1329 = vlaneseq
    %v1330 = vshrl.u32 %v1329, 7
    %v1331 = vsub.s32 %v1328, %v1330
    %v1332 = vrot.slane %v1325, %v1331
    %v1334 = vunpack.c.l.s4 1966171168
    %v1335 = vunpack.c.0.s8 %v1334
    %v1336 = vlaneseq
    %v1337 = vshrl.u32 %v1336, 7
    %v1338 = vsub.s32 %v1335, %v1337
    %v1339 = vrot.slane %v1332, %v1338
    %v1341 = vmul.f32 %v1322, %v1339
    %s1342 = scalar_lea.vmem [#allocation7], 4
    %v1343 = vld [vmem:[%s1342] ss:$8 sm:$0x3]
    %v1345 = vlaneseq
    %v1346 = vshrl.u32 %v1345, 7
    %v1347 = vsub.s32 0, %v1346
    %v1348 = vrot.slane %v1341, %v1347
    %v1349 = vlaneseq
    %v1350 = vshrl.u32 %v1349, 7
    %v1351 = vsub.s32 1, %v1350
    %v1352 = vrot.slane %v1341, %v1351
    %v1355 = vmul.f32 %v1307, %v1348
    %v1356 = vmul.f32 %v1308, %v1352
    %v1359 = vcombine.low %v1355, %v1356
    %v1361 = vunpack.c.l.s4 1966171168
    %v1362 = vunpack.c.0.s8 %v1361
    %v1363 = vlaneseq
    %v1364 = vshrl.u32 %v1363, 7
    %v1365 = vsub.s32 %v1362, %v1364
    %v1366 = vrot.slane %v1359, %v1365
    %v1368 = vunpack.c.l.s4 1966171168
    %v1369 = vunpack.c.0.s8 %v1368
    %v1370 = vlaneseq
    %v1371 = vshrl.u32 %v1370, 7
    %v1372 = vsub.s32 %v1369, %v1371
    %v1373 = vrot.slane %v1366, %v1372
    %v1375 = vsub.f32 %v1343, %v1373
    %v1376 = vmul.f32 %v1265, %v1348
    %v1377 = vmul.f32 %v1267, %v1352
    %v1378 = vmul.f32 %v1271, %v1348
    %v1379 = vmul.f32 %v1273, %v1352
    %v1381 = vlaneseq
    %v1382 = vshrl.u32 %v1381, 7
    %v1383 = vsub.s32 0, %v1382
    %v1384 = vrot.slane %v1375, %v1383
    %v1385 = vlaneseq
    %v1386 = vshrl.u32 %v1385, 7
    %v1387 = vsub.s32 1, %v1386
    %v1388 = vrot.slane %v1375, %v1387
    %v1391 = vadd.f32 %v1376, %v1384
    %v1392 = vadd.f32 %v1377, %v1388
    %v1393 = vadd.f32 %v1378, %v1384
    %v1394 = vadd.f32 %v1379, %v1388
    %v1395 = vmax.f32 %v1391, 0.0
    %v1396 = vmax.f32 %v1392, 0.0
    %v1397 = vmax.f32 %v1393, 0.0
    %v1398 = vmax.f32 %v1394, 0.0
    %s1399 = scalar_lea.vmem [#allocation4], 2560
    %v1400 = vld [vmem:[%s1399] sm:$0xff]
    %v1401 = vld [vmem:[%s1399 + $0x8] sm:$0xff]
    %v1402 = vld [vmem:[%s1399 + $0x10] sm:$0xff]
    %v1403 = vld [vmem:[%s1399 + $0x18] sm:$0xff]
    %v1404 = vld [vmem:[%s1399 + $0x20] sm:$0xff]
    %v1405 = vld [vmem:[%s1399 + $0x28] sm:$0xff]
    %v1406 = vld [vmem:[%s1399 + $0x30] sm:$0xff]
    %v1407 = vld [vmem:[%s1399 + $0x38] sm:$0xff]
    %v1408 = vld [vmem:[%s1399 + $0x40] sm:$0xff]
    %v1409 = vld [vmem:[%s1399 + $0x48] sm:$0xff]
    %v1410 = vld [vmem:[%s1399 + $0x50] sm:$0xff]
    %v1411 = vld [vmem:[%s1399 + $0x58] sm:$0xff]
    %v1412 = vld [vmem:[%s1399 + $0x60] sm:$0xff]
    %v1413 = vld [vmem:[%s1399 + $0x68] sm:$0xff]
    %v1414 = vld [vmem:[%s1399 + $0x70] sm:$0xff]
    %v1415 = vld [vmem:[%s1399 + $0x78] sm:$0xff]
    %v1416 = vld [vmem:[%s1399 + $0x80] sm:$0xff]
    %v1417 = vld [vmem:[%s1399 + $0x88] sm:$0xff]
    %v1418 = vld [vmem:[%s1399 + $0x90] sm:$0xff]
    %v1419 = vld [vmem:[%s1399 + $0x98] sm:$0xff]
    %v1420 = vld [vmem:[%s1399 + $0xa0] sm:$0xff]
    %v1421 = vld [vmem:[%s1399 + $0xa8] sm:$0xff]
    %v1422 = vld [vmem:[%s1399 + $0xb0] sm:$0xff]
    %v1423 = vld [vmem:[%s1399 + $0xb8] sm:$0xff]
    %v1424 = vld [vmem:[%s1399 + $0xc0] sm:$0xff]
    %v1425 = vld [vmem:[%s1399 + $0xc8] sm:$0xff]
    %v1426 = vld [vmem:[%s1399 + $0xd0] sm:$0xff]
    %v1427 = vld [vmem:[%s1399 + $0xd8] sm:$0xff]
    %v1428 = vld [vmem:[%s1399 + $0xe0] sm:$0xff]
    %v1429 = vld [vmem:[%s1399 + $0xe8] sm:$0xff]
    %v1430 = vld [vmem:[%s1399 + $0xf0] sm:$0xff]
    %v1431 = vld [vmem:[%s1399 + $0xf8] sm:$0xff]
    %v1432 = vld [vmem:[%s1399 + $0x100] sm:$0xff]
    %v1433 = vld [vmem:[%s1399 + $0x108] sm:$0xff]
    %v1434 = vld [vmem:[%s1399 + $0x110] sm:$0xff]
    %v1435 = vld [vmem:[%s1399 + $0x118] sm:$0xff]
    %v1436 = vld [vmem:[%s1399 + $0x120] sm:$0xff]
    %v1437 = vld [vmem:[%s1399 + $0x128] sm:$0xff]
    %v1438 = vld [vmem:[%s1399 + $0x130] sm:$0xff]
    %v1439 = vld [vmem:[%s1399 + $0x138] sm:$0xff]
    %v1440 = vld [vmem:[%s1399 + $0x140] sm:$0xff]
    %v1441 = vld [vmem:[%s1399 + $0x148] sm:$0xff]
    %v1442 = vld [vmem:[%s1399 + $0x150] sm:$0xff]
    %v1443 = vld [vmem:[%s1399 + $0x158] sm:$0xff]
    %v1444 = vld [vmem:[%s1399 + $0x160] sm:$0xff]
    %v1445 = vld [vmem:[%s1399 + $0x168] sm:$0xff]
    %v1446 = vld [vmem:[%s1399 + $0x170] sm:$0xff]
    %v1447 = vld [vmem:[%s1399 + $0x178] sm:$0xff]
    %v1448 = vld [vmem:[%s1399 + $0x180] sm:$0xff]
    %v1449 = vld [vmem:[%s1399 + $0x188] sm:$0xff]
    %v1450 = vld [vmem:[%s1399 + $0x190] sm:$0xff]
    %v1451 = vld [vmem:[%s1399 + $0x198] sm:$0xff]
    %v1452 = vld [vmem:[%s1399 + $0x1a0] sm:$0xff]
    %v1453 = vld [vmem:[%s1399 + $0x1a8] sm:$0xff]
    %v1454 = vld [vmem:[%s1399 + $0x1b0] sm:$0xff]
    %v1455 = vld [vmem:[%s1399 + $0x1b8] sm:$0xff]
    %v1456 = vld [vmem:[%s1399 + $0x1c0] sm:$0xff]
    %v1457 = vld [vmem:[%s1399 + $0x1c8] sm:$0xff]
    %v1458 = vld [vmem:[%s1399 + $0x1d0] sm:$0xff]
    %v1459 = vld [vmem:[%s1399 + $0x1d8] sm:$0xff]
    %v1460 = vld [vmem:[%s1399 + $0x1e0] sm:$0xff]
    %v1461 = vld [vmem:[%s1399 + $0x1e8] sm:$0xff]
    %v1462 = vld [vmem:[%s1399 + $0x1f0] sm:$0xff]
    %v1463 = vld [vmem:[%s1399 + $0x1f8] sm:$0xff]
    %1464 = vmatprep.subr.mxu0 %v1401
    %1465 = vmatpush1.msra.mxu0 %v1400
    %1466 = vmatprep.subr.mxu0 %v1403
    %1467 = vmatpush1.msra.mxu0 %v1402
    %1468 = vmatprep.subr.mxu0 %v1405
    %1469 = vmatpush1.msra.mxu0 %v1404
    %1470 = vmatprep.subr.mxu0 %v1407
    %1471 = vmatpush1.msra.mxu0 %v1406
    %1472 = vmatprep.subr.mxu0 %v1409
    %1473 = vmatpush1.msra.mxu0 %v1408
    %1474 = vmatprep.subr.mxu0 %v1411
    %1475 = vmatpush1.msra.mxu0 %v1410
    %1476 = vmatprep.subr.mxu0 %v1413
    %1477 = vmatpush1.msra.mxu0 %v1412
    %1478 = vmatprep.subr.mxu0 %v1415
    %1479 = vmatpush1.msra.mxu0 %v1414
    %1480 = vmatprep.subr.mxu0 %v1417
    %1481 = vmatpush1.msra.mxu0 %v1416
    %1482 = vmatprep.subr.mxu0 %v1419
    %1483 = vmatpush1.msra.mxu0 %v1418
    %1484 = vmatprep.subr.mxu0 %v1421
    %1485 = vmatpush1.msra.mxu0 %v1420
    %1486 = vmatprep.subr.mxu0 %v1423
    %1487 = vmatpush1.msra.mxu0 %v1422
    %1488 = vmatprep.subr.mxu0 %v1425
    %1489 = vmatpush1.msra.mxu0 %v1424
    %1490 = vmatprep.subr.mxu0 %v1427
    %1491 = vmatpush1.msra.mxu0 %v1426
    %1492 = vmatprep.subr.mxu0 %v1429
    %1493 = vmatpush1.msra.mxu0 %v1428
    %1494 = vmatprep.subr.mxu0 %v1431
    %1495 = vmatpush1.msra.mxu0 %v1430
    %1496 = vmatprep.subr.mxu0 %v1433
    %1497 = vmatpush1.msra.mxu0 %v1432
    %1498 = vmatprep.subr.mxu0 %v1435
    %1499 = vmatpush1.msra.mxu0 %v1434
    %1500 = vmatprep.subr.mxu0 %v1437
    %1501 = vmatpush1.msra.mxu0 %v1436
    %1502 = vmatprep.subr.mxu0 %v1439
    %1503 = vmatpush1.msra.mxu0 %v1438
    %1504 = vmatprep.subr.mxu0 %v1441
    %1505 = vmatpush1.msra.mxu0 %v1440
    %1506 = vmatprep.subr.mxu0 %v1443
    %1507 = vmatpush1.msra.mxu0 %v1442
    %1508 = vmatprep.subr.mxu0 %v1445
    %1509 = vmatpush1.msra.mxu0 %v1444
    %1510 = vmatprep.subr.mxu0 %v1447
    %1511 = vmatpush1.msra.mxu0 %v1446
    %1512 = vmatprep.subr.mxu0 %v1449
    %1513 = vmatpush1.msra.mxu0 %v1448
    %1514 = vmatprep.subr.mxu0 %v1451
    %1515 = vmatpush1.msra.mxu0 %v1450
    %1516 = vmatprep.subr.mxu0 %v1453
    %1517 = vmatpush1.msra.mxu0 %v1452
    %1518 = vmatprep.subr.mxu0 %v1455
    %1519 = vmatpush1.msra.mxu0 %v1454
    %1520 = vmatprep.subr.mxu0 %v1457
    %1521 = vmatpush1.msra.mxu0 %v1456
    %1522 = vmatprep.subr.mxu0 %v1459
    %1523 = vmatpush1.msra.mxu0 %v1458
    %1524 = vmatprep.subr.mxu0 %v1461
    %1525 = vmatpush1.msra.mxu0 %v1460
    %1526 = vmatprep.subr.mxu0 %v1463
    %1527 = vmatpush1.msra.mxu0 %v1462
    %1528 = vmatprep.mubr.f32.mxu0 %v1396
    %1529 = vmatmul.mubr.f32.gmra.mrb[0].mxu0 %v1395
    %v1530 = vpop.f32.mrb[0].mxu0
    %v1531 = vadd.f32 0.0, %v1530
    %v1532 = vpop.f32.mrb[0].mxu0
    %v1533 = vadd.f32 0.0, %v1532
    %1534 = vmatprep.mubr.f32.mxu0 %v1398
    %1535 = vmatmul.mubr.f32.gmra.mrb[0].mxu0 %v1397
    %v1536 = vpop.f32.mrb[0].mxu0
    %v1537 = vadd.f32 0.0, %v1536
    %v1538 = vpop.f32.mrb[0].mxu0
    %v1539 = vadd.f32 0.0, %v1538
    %1540 = vdwg.mxu0
    %v1541 = vadd.f32 %v1531, %v1537
    %v1542 = vrot.slane %v1541, 4
    %v1543 = vadd.f32 %v1541, %v1542
    %v1544 = vrot.slane %v1543, 2
    %v1545 = vadd.f32 %v1543, %v1544
    %v1546 = vrot.slane %v1545, 1
    %v1547 = vadd.f32 %v1545, %v1546
    %v1548 = vadd.f32 %v1533, %v1539
    %v1549 = vrot.slane %v1548, 4
    %v1550 = vadd.f32 %v1548, %v1549
    %v1551 = vrot.slane %v1550, 2
    %v1552 = vadd.f32 %v1550, %v1551
    %v1553 = vrot.slane %v1552, 1
    %v1554 = vadd.f32 %v1552, %v1553
    %v1555 = vmul.f32 %v1531, %v1531
    %v1556 = vmul.f32 %v1533, %v1533
    %v1557 = vmul.f32 %v1537, %v1537
    %v1558 = vmul.f32 %v1539, %v1539
    %v1559 = vadd.f32 %v1555, %v1557
    %v1560 = vrot.slane %v1559, 4
    %v1561 = vadd.f32 %v1559, %v1560
    %v1562 = vrot.slane %v1561, 2
    %v1563 = vadd.f32 %v1561, %v1562
    %v1564 = vrot.slane %v1563, 1
    %v1565 = vadd.f32 %v1563, %v1564
    %v1566 = vadd.f32 %v1556, %v1558
    %v1567 = vrot.slane %v1566, 4
    %v1568 = vadd.f32 %v1566, %v1567
    %v1569 = vrot.slane %v1568, 2
    %v1570 = vadd.f32 %v1568, %v1569
    %v1571 = vrot.slane %v1570, 1
    %v1572 = vadd.f32 %v1570, %v1571
    %v1573 = vmul.f32 %v1547, 0.0625
    %v1574 = vmul.f32 %v1554, 0.0625
    %v1575 = vmul.f32 %v1565, 0.0625
    %v1576 = vmul.f32 %v1572, 0.0625
    %v1577 = vmul.f32 %v1573, %v1573
    %v1578 = vmul.f32 %v1574, %v1574
    %v1579 = vsub.f32 %v1575, %v1577
    %v1580 = vsub.f32 %v1576, %v1578
    %v1581 = vmax.f32 %v1579, 0.0
    %v1582 = vmax.f32 %v1580, 0.0
    %v1583 = vadd.f32 %v1581, 1e-05
    %v1584 = vadd.f32 %v1582, 1e-05
    %v1585 = vrsqrt.pop %v1583
    %v1586 = vrsqrt.pop %v1584
    %s1587 = scalar_lea.vmem [#allocation6], 5
    %v1588 = vld [vmem:[%s1587] ss:$8 sm:$0x3]
    %v1591 = vcombine.low %v1585, %v1586
    %v1593 = vunpack.c.l.s4 1966171168
    %v1594 = vunpack.c.0.s8 %v1593
    %v1595 = vlaneseq
    %v1596 = vshrl.u32 %v1595, 7
    %v1597 = vsub.s32 %v1594, %v1596
    %v1598 = vrot.slane %v1591, %v1597
    %v1600 = vunpack.c.l.s4 1966171168
    %v1601 = vunpack.c.0.s8 %v1600
    %v1602 = vlaneseq
    %v1603 = vshrl.u32 %v1602, 7
    %v1604 = vsub.s32 %v1601, %v1603
    %v1605 = vrot.slane %v1598, %v1604
    %v1607 = vmul.f32 %v1588, %v1605
    %s1608 = scalar_lea.vmem [#allocation7], 5
    %v1609 = vld [vmem:[%s1608] ss:$8 sm:$0x3]
    %v1611 = vlaneseq
    %v1612 = vshrl.u32 %v1611, 7
    %v1613 = vsub.s32 0, %v1612
    %v1614 = vrot.slane %v1607, %v1613
    %v1615 = vlaneseq
    %v1616 = vshrl.u32 %v1615, 7
    %v1617 = vsub.s32 1, %v1616
    %v1618 = vrot.slane %v1607, %v1617
    %v1621 = vmul.f32 %v1573, %v1614
    %v1622 = vmul.f32 %v1574, %v1618
    %v1625 = vcombine.low %v1621, %v1622
    %v1627 = vunpack.c.l.s4 1966171168
    %v1628 = vunpack.c.0.s8 %v1627
    %v1629 = vlaneseq
    %v1630 = vshrl.u32 %v1629, 7
    %v1631 = vsub.s32 %v1628, %v1630
    %v1632 = vrot.slane %v1625, %v1631
    %v1634 = vunpack.c.l.s4 1966171168
    %v1635 = vunpack.c.0.s8 %v1634
    %v1636 = vlaneseq
    %v1637 = vshrl.u32 %v1636, 7
    %v1638 = vsub.s32 %v1635, %v1637
    %v1639 = vrot.slane %v1632, %v1638
    %v1641 = vsub.f32 %v1609, %v1639
    %v1642 = vmul.f32 %v1531, %v1614
    %v1643 = vmul.f32 %v1533, %v1618
    %v1644 = vmul.f32 %v1537, %v1614
    %v1645 = vmul.f32 %v1539, %v1618
    %v1647 = vlaneseq
    %v1648 = vshrl.u32 %v1647, 7
    %v1649 = vsub.s32 0, %v1648
    %v1650 = vrot.slane %v1641, %v1649
    %v1651 = vlaneseq
    %v1652 = vshrl.u32 %v1651, 7
    %v1653 = vsub.s32 1, %v1652
    %v1654 = vrot.slane %v1641, %v1653
    %v1657 = vadd.f32 %v1642, %v1650
    %v1658 = vadd.f32 %v1643, %v1654
    %v1659 = vadd.f32 %v1644, %v1650
    %v1660 = vadd.f32 %v1645, %v1654
    %v1661 = vmax.f32 %v1657, 0.0
    %v1662 = vmax.f32 %v1658, 0.0
    %v1663 = vmax.f32 %v1659, 0.0
    %v1664 = vmax.f32 %v1660, 0.0
    %s1665 = scalar_lea.vmem [#allocation4], 3072
    %v1666 = vld [vmem:[%s1665] sm:$0xff]
    %v1667 = vld [vmem:[%s1665 + $0x8] sm:$0xff]
    %v1668 = vld [vmem:[%s1665 + $0x10] sm:$0xff]
    %v1669 = vld [vmem:[%s1665 + $0x18] sm:$0xff]
    %v1670 = vld [vmem:[%s1665 + $0x20] sm:$0xff]
    %v1671 = vld [vmem:[%s1665 + $0x28] sm:$0xff]
    %v1672 = vld [vmem:[%s1665 + $0x30] sm:$0xff]
    %v1673 = vld [vmem:[%s1665 + $0x38] sm:$0xff]
    %v1674 = vld [vmem:[%s1665 + $0x40] sm:$0xff]
    %v1675 = vld [vmem:[%s1665 + $0x48] sm:$0xff]
    %v1676 = vld [vmem:[%s1665 + $0x50] sm:$0xff]
    %v1677 = vld [vmem:[%s1665 + $0x58] sm:$0xff]
    %v1678 = vld [vmem:[%s1665 + $0x60] sm:$0xff]
    %v1679 = vld [vmem:[%s1665 + $0x68] sm:$0xff]
    %v1680 = vld [vmem:[%s1665 + $0x70] sm:$0xff]
    %v1681 = vld [vmem:[%s1665 + $0x78] sm:$0xff]
    %v1682 = vld [vmem:[%s1665 + $0x80] sm:$0xff]
    %v1683 = vld [vmem:[%s1665 + $0x88] sm:$0xff]
    %v1684 = vld [vmem:[%s1665 + $0x90] sm:$0xff]
    %v1685 = vld [vmem:[%s1665 + $0x98] sm:$0xff]
    %v1686 = vld [vmem:[%s1665 + $0xa0] sm:$0xff]
    %v1687 = vld [vmem:[%s1665 + $0xa8] sm:$0xff]
    %v1688 = vld [vmem:[%s1665 + $0xb0] sm:$0xff]
    %v1689 = vld [vmem:[%s1665 + $0xb8] sm:$0xff]
    %v1690 = vld [vmem:[%s1665 + $0xc0] sm:$0xff]
    %v1691 = vld [vmem:[%s1665 + $0xc8] sm:$0xff]
    %v1692 = vld [vmem:[%s1665 + $0xd0] sm:$0xff]
    %v1693 = vld [vmem:[%s1665 + $0xd8] sm:$0xff]
    %v1694 = vld [vmem:[%s1665 + $0xe0] sm:$0xff]
    %v1695 = vld [vmem:[%s1665 + $0xe8] sm:$0xff]
    %v1696 = vld [vmem:[%s1665 + $0xf0] sm:$0xff]
    %v1697 = vld [vmem:[%s1665 + $0xf8] sm:$0xff]
    %v1698 = vld [vmem:[%s1665 + $0x100] sm:$0xff]
    %v1699 = vld [vmem:[%s1665 + $0x108] sm:$0xff]
    %v1700 = vld [vmem:[%s1665 + $0x110] sm:$0xff]
    %v1701 = vld [vmem:[%s1665 + $0x118] sm:$0xff]
    %v1702 = vld [vmem:[%s1665 + $0x120] sm:$0xff]
    %v1703 = vld [vmem:[%s1665 + $0x128] sm:$0xff]
    %v1704 = vld [vmem:[%s1665 + $0x130] sm:$0xff]
    %v1705 = vld [vmem:[%s1665 + $0x138] sm:$0xff]
    %v1706 = vld [vmem:[%s1665 + $0x140] sm:$0xff]
    %v1707 = vld [vmem:[%s1665 + $0x148] sm:$0xff]
    %v1708 = vld [vmem:[%s1665 + $0x150] sm:$0xff]
    %v1709 = vld [vmem:[%s1665 + $0x158] sm:$0xff]
    %v1710 = vld [vmem:[%s1665 + $0x160] sm:$0xff]
    %v1711 = vld [vmem:[%s1665 + $0x168] sm:$0xff]
    %v1712 = vld [vmem:[%s1665 + $0x170] sm:$0xff]
    %v1713 = vld [vmem:[%s1665 + $0x178] sm:$0xff]
    %v1714 = vld [vmem:[%s1665 + $0x180] sm:$0xff]
    %v1715 = vld [vmem:[%s1665 + $0x188] sm:$0xff]
    %v1716 = vld [vmem:[%s1665 + $0x190] sm:$0xff]
    %v1717 = vld [vmem:[%s1665 + $0x198] sm:$0xff]
    %v1718 = vld [vmem:[%s1665 + $0x1a0] sm:$0xff]
    %v1719 = vld [vmem:[%s1665 + $0x1a8] sm:$0xff]
    %v1720 = vld [vmem:[%s1665 + $0x1b0] sm:$0xff]
    %v1721 = vld [vmem:[%s1665 + $0x1b8] sm:$0xff]
    %v1722 = vld [vmem:[%s1665 + $0x1c0] sm:$0xff]
    %v1723 = vld [vmem:[%s1665 + $0x1c8] sm:$0xff]
    %v1724 = vld [vmem:[%s1665 + $0x1d0] sm:$0xff]
    %v1725 = vld [vmem:[%s1665 + $0x1d8] sm:$0xff]
    %v1726 = vld [vmem:[%s1665 + $0x1e0] sm:$0xff]
    %v1727 = vld [vmem:[%s1665 + $0x1e8] sm:$0xff]
    %v1728 = vld [vmem:[%s1665 + $0x1f0] sm:$0xff]
    %v1729 = vld [vmem:[%s1665 + $0x1f8] sm:$0xff]
    %1730 = vmatprep.subr.mxu0 %v1667
    %1731 = vmatpush1.msra.mxu0 %v1666
    %1732 = vmatprep.subr.mxu0 %v1669
    %1733 = vmatpush1.msra.mxu0 %v1668
    %1734 = vmatprep.subr.mxu0 %v1671
    %1735 = vmatpush1.msra.mxu0 %v1670
    %1736 = vmatprep.subr.mxu0 %v1673
    %1737 = vmatpush1.msra.mxu0 %v1672
    %1738 = vmatprep.subr.mxu0 %v1675
    %1739 = vmatpush1.msra.mxu0 %v1674
    %1740 = vmatprep.subr.mxu0 %v1677
    %1741 = vmatpush1.msra.mxu0 %v1676
    %1742 = vmatprep.subr.mxu0 %v1679
    %1743 = vmatpush1.msra.mxu0 %v1678
    %1744 = vmatprep.subr.mxu0 %v1681
    %1745 = vmatpush1.msra.mxu0 %v1680
    %1746 = vmatprep.subr.mxu0 %v1683
    %1747 = vmatpush1.msra.mxu0 %v1682
    %1748 = vmatprep.subr.mxu0 %v1685
    %1749 = vmatpush1.msra.mxu0 %v1684
    %1750 = vmatprep.subr.mxu0 %v1687
    %1751 = vmatpush1.msra.mxu0 %v1686
    %1752 = vmatprep.subr.mxu0 %v1689
    %1753 = vmatpush1.msra.mxu0 %v1688
    %1754 = vmatprep.subr.mxu0 %v1691
    %1755 = vmatpush1.msra.mxu0 %v1690
    %1756 = vmatprep.subr.mxu0 %v1693
    %1757 = vmatpush1.msra.mxu0 %v1692
    %1758 = vmatprep.subr.mxu0 %v1695
    %1759 = vmatpush1.msra.mxu0 %v1694
    %1760 = vmatprep.subr.mxu0 %v1697
    %1761 = vmatpush1.msra.mxu0 %v1696
    %1762 = vmatprep.subr.mxu0 %v1699
    %1763 = vmatpush1.msra.mxu0 %v1698
    %1764 = vmatprep.subr.mxu0 %v1701
    %1765 = vmatpush1.msra.mxu0 %v1700
    %1766 = vmatprep.subr.mxu0 %v1703
    %1767 = vmatpush1.msra.mxu0 %v1702
    %1768 = vmatprep.subr.mxu0 %v1705
    %1769 = vmatpush1.msra.mxu0 %v1704
    %1770 = vmatprep.subr.mxu0 %v1707
    %1771 = vmatpush1.msra.mxu0 %v1706
    %1772 = vmatprep.subr.mxu0 %v1709
    %1773 = vmatpush1.msra.mxu0 %v1708
    %1774 = vmatprep.subr.mxu0 %v1711
    %1775 = vmatpush1.msra.mxu0 %v1710
    %1776 = vmatprep.subr.mxu0 %v1713
    %1777 = vmatpush1.msra.mxu0 %v1712
    %1778 = vmatprep.subr.mxu0 %v1715
    %1779 = vmatpush1.msra.mxu0 %v1714
    %1780 = vmatprep.subr.mxu0 %v1717
    %1781 = vmatpush1.msra.mxu0 %v1716
    %1782 = vmatprep.subr.mxu0 %v1719
    %1783 = vmatpush1.msra.mxu0 %v1718
    %1784 = vmatprep.subr.mxu0 %v1721
    %1785 = vmatpush1.msra.mxu0 %v1720
    %1786 = vmatprep.subr.mxu0 %v1723
    %1787 = vmatpush1.msra.mxu0 %v1722
    %1788 = vmatprep.subr.mxu0 %v1725
    %1789 = vmatpush1.msra.mxu0 %v1724
    %1790 = vmatprep.subr.mxu0 %v1727
    %1791 = vmatpush1.msra.mxu0 %v1726
    %1792 = vmatprep.subr.mxu0 %v1729
    %1793 = vmatpush1.msra.mxu0 %v1728
    %1794 = vmatprep.mubr.f32.mxu0 %v1662
    %1795 = vmatmul.mubr.f32.gmra.mrb[0].mxu0 %v1661
    %v1796 = vpop.f32.mrb[0].mxu0
    %v1797 = vadd.f32 0.0, %v1796
    %v1798 = vpop.f32.mrb[0].mxu0
    %v1799 = vadd.f32 0.0, %v1798
    %1800 = vmatprep.mubr.f32.mxu0 %v1664
    %1801 = vmatmul.mubr.f32.gmra.mrb[0].mxu0 %v1663
    %v1802 = vpop.f32.mrb[0].mxu0
    %v1803 = vadd.f32 0.0, %v1802
    %v1804 = vpop.f32.mrb[0].mxu0
    %v1805 = vadd.f32 0.0, %v1804
    %1806 = vdwg.mxu0
    %v1807 = vadd.f32 %v1797, %v1803
    %v1808 = vrot.slane %v1807, 4
    %v1809 = vadd.f32 %v1807, %v1808
    %v1810 = vrot.slane %v1809, 2
    %v1811 = vadd.f32 %v1809, %v1810
    %v1812 = vrot.slane %v1811, 1
    %v1813 = vadd.f32 %v1811, %v1812
    %v1814 = vadd.f32 %v1799, %v1805
    %v1815 = vrot.slane %v1814, 4
    %v1816 = vadd.f32 %v1814, %v1815
    %v1817 = vrot.slane %v1816, 2
    %v1818 = vadd.f32 %v1816, %v1817
    %v1819 = vrot.slane %v1818, 1
    %v1820 = vadd.f32 %v1818, %v1819
    %v1821 = vmul.f32 %v1797, %v1797
    %v1822 = vmul.f32 %v1799, %v1799
    %v1823 = vmul.f32 %v1803, %v1803
    %v1824 = vmul.f32 %v1805, %v1805
    %v1825 = vadd.f32 %v1821, %v1823
    %v1826 = vrot.slane %v1825, 4
    %v1827 = vadd.f32 %v1825, %v1826
    %v1828 = vrot.slane %v1827, 2
    %v1829 = vadd.f32 %v1827, %v1828
    %v1830 = vrot.slane %v1829, 1
    %v1831 = vadd.f32 %v1829, %v1830
    %v1832 = vadd.f32 %v1822, %v1824
    %v1833 = vrot.slane %v1832, 4
    %v1834 = vadd.f32 %v1832, %v1833
    %v1835 = vrot.slane %v1834, 2
    %v1836 = vadd.f32 %v1834, %v1835
    %v1837 = vrot.slane %v1836, 1
    %v1838 = vadd.f32 %v1836, %v1837
    %v1839 = vmul.f32 %v1813, 0.0625
    %v1840 = vmul.f32 %v1820, 0.0625
    %v1841 = vmul.f32 %v1831, 0.0625
    %v1842 = vmul.f32 %v1838, 0.0625
    %v1843 = vmul.f32 %v1839, %v1839
    %v1844 = vmul.f32 %v1840, %v1840
    %v1845 = vsub.f32 %v1841, %v1843
    %v1846 = vsub.f32 %v1842, %v1844
    %v1847 = vmax.f32 %v1845, 0.0
    %v1848 = vmax.f32 %v1846, 0.0
    %v1849 = vadd.f32 %v1847, 1e-05
    %v1850 = vadd.f32 %v1848, 1e-05
    %v1851 = vrsqrt.pop %v1849
    %v1852 = vrsqrt.pop %v1850
    %s1853 = scalar_lea.vmem [#allocation6], 6
    %v1854 = vld [vmem:[%s1853] ss:$8 sm:$0x3]
    %v1857 = vcombine.low %v1851, %v1852
    %v1859 = vunpack.c.l.s4 1966171168
    %v1860 = vunpack.c.0.s8 %v1859
    %v1861 = vlaneseq
    %v1862 = vshrl.u32 %v1861, 7
    %v1863 = vsub.s32 %v1860, %v1862
    %v1864 = vrot.slane %v1857, %v1863
    %v1866 = vunpack.c.l.s4 1966171168
    %v1867 = vunpack.c.0.s8 %v1866
    %v1868 = vlaneseq
    %v1869 = vshrl.u32 %v1868, 7
    %v1870 = vsub.s32 %v1867, %v1869
    %v1871 = vrot.slane %v1864, %v1870
    %v1873 = vmul.f32 %v1854, %v1871
    %s1874 = scalar_lea.vmem [#allocation7], 6
    %v1875 = vld [vmem:[%s1874] ss:$8 sm:$0x3]
    %v1877 = vlaneseq
    %v1878 = vshrl.u32 %v1877, 7
    %v1879 = vsub.s32 0, %v1878
    %v1880 = vrot.slane %v1873, %v1879
    %v1881 = vlaneseq
    %v1882 = vshrl.u32 %v1881, 7
    %v1883 = vsub.s32 1, %v1882
    %v1884 = vrot.slane %v1873, %v1883
    %v1887 = vmul.f32 %v1839, %v1880
    %v1888 = vmul.f32 %v1840, %v1884
    %v1891 = vcombine.low %v1887, %v1888
    %v1893 = vunpack.c.l.s4 1966171168
    %v1894 = vunpack.c.0.s8 %v1893
    %v1895 = vlaneseq
    %v1896 = vshrl.u32 %v1895, 7
    %v1897 = vsub.s32 %v1894, %v1896
    %v1898 = vrot.slane %v1891, %v1897
    %v1900 = vunpack.c.l.s4 1966171168
    %v1901 = vunpack.c.0.s8 %v1900
    %v1902 = vlaneseq
    %v1903 = vshrl.u32 %v1902, 7
    %v1904 = vsub.s32 %v1901, %v1903
    %v1905 = vrot.slane %v1898, %v1904
    %v1907 = vsub.f32 %v1875, %v1905
    %v1908 = vmul.f32 %v1797, %v1880
    %v1909 = vmul.f32 %v1799, %v1884
    %v1910 = vmul.f32 %v1803, %v1880
    %v1911 = vmul.f32 %v1805, %v1884
    %v1913 = vlaneseq
    %v1914 = vshrl.u32 %v1913, 7
    %v1915 = vsub.s32 0, %v1914
    %v1916 = vrot.slane %v1907, %v1915
    %v1917 = vlaneseq
    %v1918 = vshrl.u32 %v1917, 7
    %v1919 = vsub.s32 1, %v1918
    %v1920 = vrot.slane %v1907, %v1919
    %v1923 = vadd.f32 %v1908, %v1916
    %v1924 = vadd.f32 %v1909, %v1920
    %v1925 = vadd.f32 %v1910, %v1916
    %v1926 = vadd.f32 %v1911, %v1920
    %v1927 = vmax.f32 %v1923, 0.0
    %v1928 = vmax.f32 %v1924, 0.0
    %v1929 = vmax.f32 %v1925, 0.0
    %v1930 = vmax.f32 %v1926, 0.0
    %s1931 = scalar_lea.vmem [#allocation4], 3584
    %v1932 = vld [vmem:[%s1931] ss:$8 sm:$0x3]
    %v1933 = vld [vmem:[#allocation7 + $0x7] ss:$0 sm:$0xff]
    %v1935 = vlaneseq
    %v1936 = vshrl.u32 %v1935, 7
    %v1937 = vsub.s32 0, %v1936
    %v1938 = vrot.slane %v1932, %v1937
    %v1939 = vlaneseq
    %v1940 = vshrl.u32 %v1939, 7
    %v1941 = vsub.s32 1, %v1940
    %v1942 = vrot.slane %v1932, %v1941
    %v1945 = vmul.f32 %v1927, %v1938
    %v1946 = vmul.f32 %v1928, %v1942
    %v1947 = vmul.f32 %v1929, %v1938
    %v1948 = vmul.f32 %v1930, %v1942
    %v1949 = vadd.f32 %v1945, %v1946
    %1950 = vadd.xlane.f32.xlu0 %v1949
    %v1951 = vpop.xlane.xlu0 %1950
    %v1952 = vadd.f32 %v1947, %v1948
    %1953 = vadd.xlane.f32.xlu0 %v1952
    %v1954 = vpop.xlane.xlu0 %1953
    %v1955 = vadd.f32 %v1951, %v1933
    %v1956 = vadd.f32 %v1954, %v1933
    %vm1957 = vcmask 7168
    %1958 = vst.msk [vmem:[%s4] sm:$0xff] %vm1957, %v1955
    %1959 = vst.msk [vmem:[%s4 + $0x8] sm:$0xff] %vm1957, %v1956
    // Predicated region
    $region34: #{tpu_custom_call.1} parent=1 // pred_check
      _
    $region35: #{tpu_custom_call.1} parent=1 // pred_check_branch
      %1961 = sbr.rel (0) target = $region37
    $region36: #{tpu_custom_call.1} parent=1 // pred_region
      _
    $region37: #{tpu_custom_call.1} parent=1 // pred_fallthru
      _
    // Predicated region
    $region38: #{tpu_custom_call.1} parent=1 // pred_check
      _
    $region39: #{tpu_custom_call.1} parent=1 // pred_check_branch
      %1963 = sbr.rel (0) target = $region41
    $region40: #{tpu_custom_call.1} parent=1 // pred_region
      _
    $region41: #{tpu_custom_call.1} parent=1 // pred_fallthru
      _
    %1964 = vsyncpa [#allocation3], 1
    %1965 = vsyncpa [#allocation5], 1
    %1966 = vsyncpa [#allocation8], 1

</llo_original>
